<compile_context>
chip_gen: v5e
topology: v5e:2x2
jax: 0.10.0
libtpu: 0.0.40
codegen_flags: <defaults>
</compile_context>

<pallas_src>
import functools

import jax
import jax.numpy as jnp
from jax import lax
from jax.experimental import pallas as pl
from jax.experimental.pallas import tpu as pltpu

_BN_EPS = 1e-5
_MM_DTYPE = jnp.bfloat16            # MXU-native operand dtype; accumulation stays f32
_COMPILER_PARAMS = pltpu.CompilerParams(dimension_semantics=("arbitrary",))


def _full_spec(shape):
    nd = len(shape)
    return pl.BlockSpec(shape, lambda *_: (0,) * nd)


def _eye(d, dtype=jnp.float32):
    return (lax.broadcasted_iota(jnp.int32, (d, d), 0) ==
            lax.broadcasted_iota(jnp.int32, (d, d), 1)).astype(dtype)


def _bn_train(h, gamma, beta, eps):
    # BatchNorm1d with batch statistics (module default training flag), biased var.
    mean = jnp.mean(h, axis=0, keepdims=True)
    var = jnp.mean(jnp.square(h - mean), axis=0, keepdims=True)
    return (h - mean) * lax.rsqrt(var + eps) * gamma + beta


def _spd_inverse(a):
    """Gauss-Jordan inverse of a small SPD matrix (f32).

    No pivoting is needed for SPD input; every step is masked VPU work plus
    XLU reductions, loop trip count = d.  Replaces torch.inverse in-kernel
    (previously a host-side jnp.linalg.inv between two pallas_calls).  Also
    usable as plain JAX, which the demo's reference check exploits.
    """
    d = a.shape[0]
    row_ids = lax.broadcasted_iota(jnp.int32, (d, 1), 0)
    col_ids = lax.broadcasted_iota(jnp.int32, (1, d), 1)

    def body(k, carry):
        acur, icur = carry
        rk = (row_ids == k).astype(jnp.float32)              # (d,1) one-hot row mask
        ck = (col_ids == k).astype(jnp.float32)              # (1,d) one-hot col mask
        prow_a = jnp.sum(acur * rk, axis=0, keepdims=True)   # pivot row of A
        prow_i = jnp.sum(icur * rk, axis=0, keepdims=True)   # pivot row of A^-1 part
        pivot = jnp.sum(prow_a * ck, axis=1, keepdims=True)  # (1,1)
        inv_p = 1.0 / pivot
        prow_a = prow_a * inv_p
        prow_i = prow_i * inv_p
        colk = jnp.sum(acur * ck, axis=1, keepdims=True)     # (d,1) column k of A
        # Eliminate column k everywhere, then overwrite row k with the normalized
        # pivot row (row k was cancelled to ~0 by the elimination).
        acur = acur - colk * prow_a + rk * prow_a
        icur = icur - colk * prow_i + rk * prow_i
        return acur, icur

    _, inv = lax.fori_loop(0, d, body, (a, _eye(d)))
    return inv


# ---------------------------------------------------------------------------
# Fused kernel bodies
# ---------------------------------------------------------------------------
def _mlp_and_binit_t(x_ref, wi_ref, pi_ref, w1_ref, p1_ref, w2_ref, p2_ref,
                     w3_ref, b3_ref, *, eps, mm_dtype):
    """layer_init (-> B0^T, transposed in-kernel) and layer1->layer3 (-> X3)."""
    xc = x_ref[...].astype(mm_dtype)

    # layer_init: Linear + BN + tanh, then transpose (XLU) -> (nbits, batch)
    hi = jnp.dot(xc, wi_ref[...], preferred_element_type=jnp.float32) + pi_ref[0:1, :]
    b0t = jnp.tanh(_bn_train(hi, pi_ref[1:2, :], pi_ref[2:3, :], eps)).T

    # layer1: Linear + BN + ReLU
    h1 = jnp.dot(xc, w1_ref[...], preferred_element_type=jnp.float32) + p1_ref[0:1, :]
    h1 = jnp.maximum(_bn_train(h1, p1_ref[1:2, :], p1_ref[2:3, :], eps), 0.0)

    # layer2: Linear + BN + ReLU
    h2 = jnp.dot(h1.astype(mm_dtype), w2_ref[...],
                 preferred_element_type=jnp.float32) + p2_ref[0:1, :]
    h2 = jnp.maximum(_bn_train(h2, p2_ref[1:2, :], p2_ref[2:3, :], eps), 0.0)

    # layer3: plain Linear
    x3 = jnp.dot(h2.astype(mm_dtype), w3_ref[...],
                 preferred_element_type=jnp.float32) + b3_ref[...]
    return x3, b0t


def _x_refine_term(x3, gamma):
    # X (X^T X + gamma I)^-1 X^T  — loop-invariant X part of A (f32 throughout).
    d = x3.shape[1]
    xtx = lax.dot_general(x3, x3, (((0,), (0,)), ((), ())),
                          preferred_element_type=jnp.float32)
    inv_x = _spd_inverse(xtx + gamma * _eye(d))
    xm = jnp.dot(x3, inv_x, preferred_element_type=jnp.float32)
    return lax.dot_general(xm, x3, (((1,), (1,)), ((), ())),
                           preferred_element_type=jnp.float32)


def _refine_loop(a, b0t, *, layers, unroll, mm_dtype):
    a_mm = a.astype(mm_dtype)          # loop-invariant operand, MXU-native

    def body(_, bc):
        return jnp.tanh(jnp.dot(a_mm, bc.astype(mm_dtype),
                                preferred_element_type=jnp.float32))

    return lax.fori_loop(0, layers, body, b0t, unroll=unroll)


def _fsdh_train_kernel(x_ref, y_ref, wi_ref, pi_ref, w1_ref, p1_ref,
                       w2_ref, p2_ref, w3_ref, b3_ref, out_ref,
                       *, eps, gamma, alpha, beta, layers, unroll, mm_dtype):
    x3, b0t = _mlp_and_binit_t(x_ref, wi_ref, pi_ref, w1_ref, p1_ref,
                               w2_ref, p2_ref, w3_ref, b3_ref,
                               eps=eps, mm_dtype=mm_dtype)
    a = (alpha * alpha) * _x_refine_term(x3, gamma)

    y = y_ref[...]
    c = y.shape[1]
    yty = lax.dot_general(y, y, (((0,), (0,)), ((), ())),
                          preferred_element_type=jnp.float32)
    inv_y = _spd_inverse(beta * yty + gamma * _eye(c))
    ym = jnp.dot(y, inv_y, preferred_element_type=jnp.float32)
    a = a + (beta * beta) * lax.dot_general(ym, y, (((1,), (1,)), ((), ())),
                                            preferred_element_type=jnp.float32)

    out_ref[...] = _refine_loop(a, b0t, layers=layers, unroll=unroll,
                                mm_dtype=mm_dtype)


def _fsdh_eval_kernel(x_ref, wi_ref, pi_ref, w1_ref, p1_ref,
                      w2_ref, p2_ref, w3_ref, b3_ref, out_ref,
                      *, eps, gamma, alpha, layers, unroll, mm_dtype):
    x3, b0t = _mlp_and_binit_t(x_ref, wi_ref, pi_ref, w1_ref, p1_ref,
                               w2_ref, p2_ref, w3_ref, b3_ref,
                               eps=eps, mm_dtype=mm_dtype)
    a = (alpha * alpha) * _x_refine_term(x3, gamma)
    out_ref[...] = _refine_loop(a, b0t, layers=layers, unroll=unroll,
                                mm_dtype=mm_dtype)


# ---------------------------------------------------------------------------
# pallas_call wrappers
# ---------------------------------------------------------------------------
def fsdh_forward_train(x, y, p, *, layers, alpha, beta, gamma):
    bsz = x.shape[0]
    kernel = functools.partial(
        _fsdh_train_kernel, eps=_BN_EPS, gamma=float(gamma), alpha=float(alpha),
        beta=float(beta), layers=int(layers),
        unroll=max(1, min(int(layers), 4)), mm_dtype=_MM_DTYPE)
    args = (x, y, p["wi"], p["pi"], p["w1"], p["p1"], p["w2"], p["p2"],
            p["w3"], p["b3"])
    return pl.pallas_call(
        kernel,
        out_shape=jax.ShapeDtypeStruct((bsz, bsz), jnp.float32),
        grid=(1,),
        in_specs=[_full_spec(a.shape) for a in args],
        out_specs=_full_spec((bsz, bsz)),
        compiler_params=_COMPILER_PARAMS,
    )(*args)


def fsdh_forward_eval(x, p, *, layers, alpha, gamma):
    bsz = x.shape[0]
    kernel = functools.partial(
        _fsdh_eval_kernel, eps=_BN_EPS, gamma=float(gamma), alpha=float(alpha),
        layers=int(layers), unroll=max(1, min(int(layers), 4)),
        mm_dtype=_MM_DTYPE)
    args = (x, p["wi"], p["pi"], p["w1"], p["p1"], p["w2"], p["p2"],
            p["w3"], p["b3"])
    return pl.pallas_call(
        kernel,
        out_shape=jax.ShapeDtypeStruct((bsz, bsz), jnp.float32),
        grid=(1,),
        in_specs=[_full_spec(a.shape) for a in args],
        out_specs=_full_spec((bsz, bsz)),
        compiler_params=_COMPILER_PARAMS,
    )(*args)


# ---------------------------------------------------------------------------
# Model
# ---------------------------------------------------------------------------
def _linear_init(key, fan_in, fan_out):
    # PyTorch default Linear init: U(-1/sqrt(fan_in), 1/sqrt(fan_in))
    kw, kb = jax.random.split(key)
    bound = 1.0 / jnp.sqrt(float(fan_in))
    w = jax.random.uniform(kw, (fan_in, fan_out), jnp.float32, -bound, bound)
    b = jax.random.uniform(kb, (1, fan_out), jnp.float32, -bound, bound)
    return w, b


class MyModelPallas:
    def __init__(self, fsdh_input_dim, fsdh_hidden_1, fsdh_hidden_2, fsdh_out_dim,
                 layers, beta=0.3, gamma=0.001, alpha=1.0, mu=0.1, nbits=32,
                 batch_size=100, key=None):
        self.layers = int(layers)
        self.beta = float(beta)
        self.gamma = float(gamma)
        self.alpha = float(alpha)
        self.mu = mu
        self.nbits = nbits
        self.batch_size = batch_size

        key = jax.random.PRNGKey(42) if key is None else key
        k1, k2, k3, k4 = jax.random.split(key, 4)
        w1, b1 = _linear_init(k1, fsdh_input_dim, fsdh_hidden_1)
        w2, b2 = _linear_init(k2, fsdh_hidden_1, fsdh_hidden_2)
        w3, b3 = _linear_init(k3, fsdh_hidden_2, fsdh_out_dim)
        wi, bi = _linear_init(k4, fsdh_input_dim, nbits)

        def pack(bias, width):
            # rows: [Linear bias, BN gamma (ones), BN beta (zeros)]
            return jnp.concatenate(
                [bias, jnp.ones((1, width), jnp.float32),
                 jnp.zeros((1, width), jnp.float32)], axis=0)

        # Weights pre-cast to bf16 (MXU-native; halves weight DMA/VMEM).  Biases
        # and BN affine parameters stay f32.
        self.params = dict(
            wi=wi.astype(_MM_DTYPE), pi=pack(bi, nbits),
            w1=w1.astype(_MM_DTYPE), p1=pack(b1, fsdh_hidden_1),
            w2=w2.astype(_MM_DTYPE), p2=pack(b2, fsdh_hidden_2),
            w3=w3.astype(_MM_DTYPE), b3=b3,
        )
        self._fwd = jax.jit(self._forward_impl, static_argnames=("train",))

    def _forward_impl(self, X, Y, *, train):
        if train:
            return fsdh_forward_train(X, Y.astype(jnp.float32), self.params,
                                      layers=self.layers, alpha=self.alpha,
                                      beta=self.beta, gamma=self.gamma)
        return fsdh_forward_eval(X, self.params, layers=self.layers,
                                 alpha=self.alpha, gamma=self.gamma)

    def forward(self, X, Y, train):
        if X.shape[0] != self.nbits:
            raise ValueError("original My_model.forward only shape-checks when "
                             "batch_size == nbits")
        return self._fwd(X, Y, train=bool(train))


# ---------------------------------------------------------------------------
# Pure-JAX reference (mirrors the kernel math; used only for the demo check)
# ---------------------------------------------------------------------------
def reference_forward(X, Y, p, *, train, layers, alpha, beta, gamma):
    mmd = _MM_DTYPE
    xc = X.astype(mmd)
    pi, p1, p2 = p["pi"], p["p1"], p["p2"]

    hi = jnp.dot(xc, p["wi"], preferred_element_type=jnp.float32) + pi[0:1]
    b0t = jnp.tanh(_bn_train(hi, pi[1:2], pi[2:3], _BN_EPS)).T
    h1 = jnp.maximum(_bn_train(
        jnp.dot(xc, p["w1"], preferred_element_type=jnp.float32) + p1[0:1],
        p1[1:2], p1[2:3], _BN_EPS), 0.0)
    h2 = jnp.maximum(_bn_train(
        jnp.dot(h1.astype(mmd), p["w2"], preferred_element_type=jnp.float32) + p2[0:1],
        p2[1:2], p2[2:3], _BN_EPS), 0.0)
    x3 = jnp.dot(h2.astype(mmd), p["w3"], preferred_element_type=jnp.float32) + p["b3"]

    d = x3.shape[1]
    inv_x = _spd_inverse(x3.T @ x3 + gamma * jnp.eye(d, dtype=jnp.float32))
    a = (alpha * alpha) * (x3 @ inv_x @ x3.T)
    if train:
        c = Y.shape[1]
        inv_y = _spd_inverse(beta * (Y.T @ Y) + gamma * jnp.eye(c, dtype=jnp.float32))
        a = a + (beta * beta) * (Y @ inv_y @ Y.T)

    a_mm = a.astype(mmd)
    bcur = b0t
    for _ in range(layers):
        bcur = jnp.tanh(jnp.dot(a_mm, bcur.astype(mmd),
                                preferred_element_type=jnp.float32))
    return bcur


# ---------------------------------------------------------------------------
# Demo
# ---------------------------------------------------------------------------
if __name__ == "__main__":
    # Small shapes. NOTE: the original forward only shape-checks when batch == nbits.
    batch = 8
    nbits = 8
    fsdh_input_dim = 32
    fsdh_hidden_1 = 64
    fsdh_hidden_2 = 32
    fsdh_out_dim = 16
    n_classes = 4
    layers = 3

    root = jax.random.PRNGKey(0)
    k_param, k_x, k_y, k_spd = jax.random.split(root, 4)

    model = MyModelPallas(fsdh_input_dim, fsdh_hidden_1, fsdh_hidden_2,
                          fsdh_out_dim, layers, nbits=nbits, batch_size=batch,
                          key=k_param)

    X = jax.random.normal(k_x, (batch, fsdh_input_dim), jnp.float32)
    labels = jax.random.randint(k_y, (batch,), 0, n_classes)
    Y = jax.nn.one_hot(labels, n_classes, dtype=jnp.float32)

    B_train = model.forward(X, Y, train=True)
    B_eval = model.forward(X, Y, train=False)
    jax.block_until_ready((B_train, B_eval))

    assert B_train.shape == (batch, batch) and B_eval.shape == (batch, batch)
    assert bool(jnp.all(jnp.isfinite(B_train))) and bool(jnp.all(jnp.isfinite(B_eval)))

    # 1) Validate the Gauss-Jordan SPD inverse (plain-JAX trace of the same code
    #    that runs in-kernel) against jnp.linalg.inv on a well-conditioned SPD.
    cmat = jax.random.normal(k_spd, (fsdh_out_dim, fsdh_out_dim), jnp.float32) * 0.25
    spd = cmat @ cmat.T + jnp.eye(fsdh_out_dim, dtype=jnp.float32)
    gj_err = float(jnp.max(jnp.abs(_spd_inverse(spd) - jnp.linalg.inv(spd))))
    assert gj_err < 1e-4, f"Gauss-Jordan inverse mismatch: {gj_err}"

    # 2) End-to-end check of the fused kernels against the pure-JAX mirror
    #    (loose tolerance absorbs accumulation-order / bf16 rounding differences).
    ref_train = reference_forward(X, Y, model.params, train=True, layers=layers,
                                  alpha=model.alpha, beta=model.beta,
                                  gamma=model.gamma)
    ref_eval = reference_forward(X, Y, model.params, train=False, layers=layers,
                                 alpha=model.alpha, beta=model.beta,
                                 gamma=model.gamma)
    err_t = float(jnp.max(jnp.abs(B_train - ref_train)))
    err_e = float(jnp.max(jnp.abs(B_eval - ref_eval)))
    assert err_t < 5e-2 and err_e < 5e-2, (err_t, err_e)

    print("KERNEL_OK")
</pallas_src>

<mosaic_0001>
module attributes {stable_mosaic.version = 11 : i64} {
  func.func @_fsdh_train_kernel(%arg0: i32, %arg1: memref<8x32xf32, #tpu.memory_space<vmem>>, %arg2: memref<8x4xf32, #tpu.memory_space<vmem>>, %arg3: memref<32x8xbf16, #tpu.memory_space<vmem>>, %arg4: memref<3x8xf32, #tpu.memory_space<vmem>>, %arg5: memref<32x64xbf16, #tpu.memory_space<vmem>>, %arg6: memref<3x64xf32, #tpu.memory_space<vmem>>, %arg7: memref<64x32xbf16, #tpu.memory_space<vmem>>, %arg8: memref<3x32xf32, #tpu.memory_space<vmem>>, %arg9: memref<32x16xbf16, #tpu.memory_space<vmem>>, %arg10: memref<1x16xf32, #tpu.memory_space<vmem>>, %arg11: memref<8x8xf32, #tpu.memory_space<vmem>>) attributes {dimension_semantics = [#tpu.dimension_semantics<arbitrary>], iteration_bounds = array<i64: 1>, scalar_prefetch = 0 : i64, scratch_operands = 0 : i64, tpu.core_type = #tpu.core_type<tc>, window_params = [{pipeline_mode = #tpu.pipeline_mode<synchronous>, transform_indices = @transform_0, window_bounds = array<i64: 8, 32>}, {pipeline_mode = #tpu.pipeline_mode<synchronous>, transform_indices = @transform_1, window_bounds = array<i64: 8, 4>}, {pipeline_mode = #tpu.pipeline_mode<synchronous>, transform_indices = @transform_2, window_bounds = array<i64: 32, 8>}, {pipeline_mode = #tpu.pipeline_mode<synchronous>, transform_indices = @transform_3, window_bounds = array<i64: 3, 8>}, {pipeline_mode = #tpu.pipeline_mode<synchronous>, transform_indices = @transform_4, window_bounds = array<i64: 32, 64>}, {pipeline_mode = #tpu.pipeline_mode<synchronous>, transform_indices = @transform_5, window_bounds = array<i64: 3, 64>}, {pipeline_mode = #tpu.pipeline_mode<synchronous>, transform_indices = @transform_6, window_bounds = array<i64: 64, 32>}, {pipeline_mode = #tpu.pipeline_mode<synchronous>, transform_indices = @transform_7, window_bounds = array<i64: 3, 32>}, {pipeline_mode = #tpu.pipeline_mode<synchronous>, transform_indices = @transform_8, window_bounds = array<i64: 32, 16>}, {pipeline_mode = #tpu.pipeline_mode<synchronous>, transform_indices = @transform_9, window_bounds = array<i64: 1, 16>}, {pipeline_mode = #tpu.pipeline_mode<synchronous>, transform_indices = @transform_10, window_bounds = array<i64: 8, 8>}]} {
    %c0 = arith.constant 0 : index
    %c0_0 = arith.constant 0 : index
    %0 = vector.load %arg1[%c0, %c0_0] : memref<8x32xf32, #tpu.memory_space<vmem>>, vector<8x32xf32>
    %1 = arith.truncf %0 : vector<8x32xf32> to vector<8x32xbf16>
    %c0_1 = arith.constant 0 : index
    %c0_2 = arith.constant 0 : index
    %2 = vector.load %arg3[%c0_1, %c0_2] : memref<32x8xbf16, #tpu.memory_space<vmem>>, vector<32x8xbf16>
    %cst = arith.constant dense<0.000000e+00> : vector<8x8xf32>
    %3 = tpu.matmul %1, %2, %cst {dimension_numbers = #tpu.dot_dimension_numbers<[1], [0], [0], [1], [0, 0, 1, 1], [], []>} : vector<8x32xbf16>, vector<32x8xbf16>, vector<8x8xf32> -> vector<8x8xf32>
    %c0_3 = arith.constant 0 : index
    %c0_4 = arith.constant 0 : index
    %4 = vector.load %arg4[%c0_3, %c0_4] : memref<3x8xf32, #tpu.memory_space<vmem>>, vector<1x8xf32>
    %5 = vector.broadcast %4 : vector<1x8xf32> to vector<8x8xf32>
    %6 = arith.addf %3, %5 : vector<8x8xf32>
    %c1 = arith.constant 1 : index
    %c0_5 = arith.constant 0 : index
    %7 = vector.load %arg4[%c1, %c0_5] : memref<3x8xf32, #tpu.memory_space<vmem>>, vector<1x8xf32>
    %c2 = arith.constant 2 : index
    %c0_6 = arith.constant 0 : index
    %8 = vector.load %arg4[%c2, %c0_6] : memref<3x8xf32, #tpu.memory_space<vmem>>, vector<1x8xf32>
    %cst_7 = arith.constant dense<0.000000e+00> : vector<8xf32>
    %9 = vector.multi_reduction <add>, %6, %cst_7 [0] : vector<8x8xf32> to vector<8xf32>
    %10 = vector.shape_cast %9 : vector<8xf32> to vector<1x8xf32>
    %cst_8 = arith.constant 8.000000e+00 : f32
    %11 = vector.broadcast %cst_8 : f32 to vector<1x8xf32>
    %12 = arith.divf %10, %11 : vector<1x8xf32>
    %13 = vector.broadcast %12 : vector<1x8xf32> to vector<8x8xf32>
    %14 = arith.subf %6, %13 : vector<8x8xf32>
    %15 = arith.mulf %14, %14 : vector<8x8xf32>
    %cst_9 = arith.constant dense<0.000000e+00> : vector<8xf32>
    %16 = vector.multi_reduction <add>, %15, %cst_9 [0] : vector<8x8xf32> to vector<8xf32>
    %17 = vector.shape_cast %16 : vector<8xf32> to vector<1x8xf32>
    %cst_10 = arith.constant 8.000000e+00 : f32
    %18 = vector.broadcast %cst_10 : f32 to vector<1x8xf32>
    %19 = arith.divf %17, %18 : vector<1x8xf32>
    %20 = vector.broadcast %12 : vector<1x8xf32> to vector<8x8xf32>
    %21 = arith.subf %6, %20 : vector<8x8xf32>
    %cst_11 = arith.constant 9.99999974E-6 : f32
    %22 = vector.broadcast %cst_11 : f32 to vector<1x8xf32>
    %23 = arith.addf %19, %22 : vector<1x8xf32>
    %24 = math.rsqrt %23 : vector<1x8xf32>
    %25 = vector.broadcast %24 : vector<1x8xf32> to vector<8x8xf32>
    %26 = arith.mulf %21, %25 : vector<8x8xf32>
    %27 = vector.broadcast %7 : vector<1x8xf32> to vector<8x8xf32>
    %28 = arith.mulf %26, %27 : vector<8x8xf32>
    %29 = vector.broadcast %8 : vector<1x8xf32> to vector<8x8xf32>
    %30 = arith.addf %28, %29 : vector<8x8xf32>
    %31 = math.tanh %30 : vector<8x8xf32>
    %32 = tpu.transpose %31, [1, 0] : vector<8x8xf32> -> vector<8x8xf32>
    %c0_12 = arith.constant 0 : index
    %c0_13 = arith.constant 0 : index
    %33 = vector.load %arg5[%c0_12, %c0_13] : memref<32x64xbf16, #tpu.memory_space<vmem>>, vector<32x64xbf16>
    %cst_14 = arith.constant dense<0.000000e+00> : vector<8x64xf32>
    %34 = tpu.matmul %1, %33, %cst_14 {dimension_numbers = #tpu.dot_dimension_numbers<[1], [0], [0], [1], [0, 0, 1, 1], [], []>} : vector<8x32xbf16>, vector<32x64xbf16>, vector<8x64xf32> -> vector<8x64xf32>
    %c0_15 = arith.constant 0 : index
    %c0_16 = arith.constant 0 : index
    %35 = vector.load %arg6[%c0_15, %c0_16] : memref<3x64xf32, #tpu.memory_space<vmem>>, vector<1x64xf32>
    %36 = vector.broadcast %35 : vector<1x64xf32> to vector<8x64xf32>
    %37 = arith.addf %34, %36 : vector<8x64xf32>
    %c1_17 = arith.constant 1 : index
    %c0_18 = arith.constant 0 : index
    %38 = vector.load %arg6[%c1_17, %c0_18] : memref<3x64xf32, #tpu.memory_space<vmem>>, vector<1x64xf32>
    %c2_19 = arith.constant 2 : index
    %c0_20 = arith.constant 0 : index
    %39 = vector.load %arg6[%c2_19, %c0_20] : memref<3x64xf32, #tpu.memory_space<vmem>>, vector<1x64xf32>
    %cst_21 = arith.constant dense<0.000000e+00> : vector<64xf32>
    %40 = vector.multi_reduction <add>, %37, %cst_21 [0] : vector<8x64xf32> to vector<64xf32>
    %41 = vector.shape_cast %40 : vector<64xf32> to vector<1x64xf32>
    %cst_22 = arith.constant 8.000000e+00 : f32
    %42 = vector.broadcast %cst_22 : f32 to vector<1x64xf32>
    %43 = arith.divf %41, %42 : vector<1x64xf32>
    %44 = vector.broadcast %43 : vector<1x64xf32> to vector<8x64xf32>
    %45 = arith.subf %37, %44 : vector<8x64xf32>
    %46 = arith.mulf %45, %45 : vector<8x64xf32>
    %cst_23 = arith.constant dense<0.000000e+00> : vector<64xf32>
    %47 = vector.multi_reduction <add>, %46, %cst_23 [0] : vector<8x64xf32> to vector<64xf32>
    %48 = vector.shape_cast %47 : vector<64xf32> to vector<1x64xf32>
    %cst_24 = arith.constant 8.000000e+00 : f32
    %49 = vector.broadcast %cst_24 : f32 to vector<1x64xf32>
    %50 = arith.divf %48, %49 : vector<1x64xf32>
    %51 = vector.broadcast %43 : vector<1x64xf32> to vector<8x64xf32>
    %52 = arith.subf %37, %51 : vector<8x64xf32>
    %cst_25 = arith.constant 9.99999974E-6 : f32
    %53 = vector.broadcast %cst_25 : f32 to vector<1x64xf32>
    %54 = arith.addf %50, %53 : vector<1x64xf32>
    %55 = math.rsqrt %54 : vector<1x64xf32>
    %56 = vector.broadcast %55 : vector<1x64xf32> to vector<8x64xf32>
    %57 = arith.mulf %52, %56 : vector<8x64xf32>
    %58 = vector.broadcast %38 : vector<1x64xf32> to vector<8x64xf32>
    %59 = arith.mulf %57, %58 : vector<8x64xf32>
    %60 = vector.broadcast %39 : vector<1x64xf32> to vector<8x64xf32>
    %61 = arith.addf %59, %60 : vector<8x64xf32>
    %cst_26 = arith.constant 0.000000e+00 : f32
    %62 = vector.broadcast %cst_26 : f32 to vector<8x64xf32>
    %63 = arith.maximumf %61, %62 : vector<8x64xf32>
    %64 = arith.truncf %63 : vector<8x64xf32> to vector<8x64xbf16>
    %c0_27 = arith.constant 0 : index
    %c0_28 = arith.constant 0 : index
    %65 = vector.load %arg7[%c0_27, %c0_28] : memref<64x32xbf16, #tpu.memory_space<vmem>>, vector<64x32xbf16>
    %cst_29 = arith.constant dense<0.000000e+00> : vector<8x32xf32>
    %66 = tpu.matmul %64, %65, %cst_29 {dimension_numbers = #tpu.dot_dimension_numbers<[1], [0], [0], [1], [0, 0, 1, 1], [], []>} : vector<8x64xbf16>, vector<64x32xbf16>, vector<8x32xf32> -> vector<8x32xf32>
    %c0_30 = arith.constant 0 : index
    %c0_31 = arith.constant 0 : index
    %67 = vector.load %arg8[%c0_30, %c0_31] : memref<3x32xf32, #tpu.memory_space<vmem>>, vector<1x32xf32>
    %68 = vector.broadcast %67 : vector<1x32xf32> to vector<8x32xf32>
    %69 = arith.addf %66, %68 : vector<8x32xf32>
    %c1_32 = arith.constant 1 : index
    %c0_33 = arith.constant 0 : index
    %70 = vector.load %arg8[%c1_32, %c0_33] : memref<3x32xf32, #tpu.memory_space<vmem>>, vector<1x32xf32>
    %c2_34 = arith.constant 2 : index
    %c0_35 = arith.constant 0 : index
    %71 = vector.load %arg8[%c2_34, %c0_35] : memref<3x32xf32, #tpu.memory_space<vmem>>, vector<1x32xf32>
    %cst_36 = arith.constant dense<0.000000e+00> : vector<32xf32>
    %72 = vector.multi_reduction <add>, %69, %cst_36 [0] : vector<8x32xf32> to vector<32xf32>
    %73 = vector.shape_cast %72 : vector<32xf32> to vector<1x32xf32>
    %cst_37 = arith.constant 8.000000e+00 : f32
    %74 = vector.broadcast %cst_37 : f32 to vector<1x32xf32>
    %75 = arith.divf %73, %74 : vector<1x32xf32>
    %76 = vector.broadcast %75 : vector<1x32xf32> to vector<8x32xf32>
    %77 = arith.subf %69, %76 : vector<8x32xf32>
    %78 = arith.mulf %77, %77 : vector<8x32xf32>
    %cst_38 = arith.constant dense<0.000000e+00> : vector<32xf32>
    %79 = vector.multi_reduction <add>, %78, %cst_38 [0] : vector<8x32xf32> to vector<32xf32>
    %80 = vector.shape_cast %79 : vector<32xf32> to vector<1x32xf32>
    %cst_39 = arith.constant 8.000000e+00 : f32
    %81 = vector.broadcast %cst_39 : f32 to vector<1x32xf32>
    %82 = arith.divf %80, %81 : vector<1x32xf32>
    %83 = vector.broadcast %75 : vector<1x32xf32> to vector<8x32xf32>
    %84 = arith.subf %69, %83 : vector<8x32xf32>
    %cst_40 = arith.constant 9.99999974E-6 : f32
    %85 = vector.broadcast %cst_40 : f32 to vector<1x32xf32>
    %86 = arith.addf %82, %85 : vector<1x32xf32>
    %87 = math.rsqrt %86 : vector<1x32xf32>
    %88 = vector.broadcast %87 : vector<1x32xf32> to vector<8x32xf32>
    %89 = arith.mulf %84, %88 : vector<8x32xf32>
    %90 = vector.broadcast %70 : vector<1x32xf32> to vector<8x32xf32>
    %91 = arith.mulf %89, %90 : vector<8x32xf32>
    %92 = vector.broadcast %71 : vector<1x32xf32> to vector<8x32xf32>
    %93 = arith.addf %91, %92 : vector<8x32xf32>
    %cst_41 = arith.constant 0.000000e+00 : f32
    %94 = vector.broadcast %cst_41 : f32 to vector<8x32xf32>
    %95 = arith.maximumf %93, %94 : vector<8x32xf32>
    %96 = arith.truncf %95 : vector<8x32xf32> to vector<8x32xbf16>
    %c0_42 = arith.constant 0 : index
    %c0_43 = arith.constant 0 : index
    %97 = vector.load %arg9[%c0_42, %c0_43] : memref<32x16xbf16, #tpu.memory_space<vmem>>, vector<32x16xbf16>
    %cst_44 = arith.constant dense<0.000000e+00> : vector<8x16xf32>
    %98 = tpu.matmul %96, %97, %cst_44 {dimension_numbers = #tpu.dot_dimension_numbers<[1], [0], [0], [1], [0, 0, 1, 1], [], []>} : vector<8x32xbf16>, vector<32x16xbf16>, vector<8x16xf32> -> vector<8x16xf32>
    %c0_45 = arith.constant 0 : index
    %c0_46 = arith.constant 0 : index
    %99 = vector.load %arg10[%c0_45, %c0_46] : memref<1x16xf32, #tpu.memory_space<vmem>>, vector<1x16xf32>
    %100 = vector.broadcast %99 : vector<1x16xf32> to vector<8x16xf32>
    %101 = arith.addf %98, %100 : vector<8x16xf32>
    %cst_47 = arith.constant dense<0.000000e+00> : vector<16x16xf32>
    %102 = tpu.matmul %101, %101, %cst_47 {dimension_numbers = #tpu.dot_dimension_numbers<[0], [0], [1], [1], [0, 1, 1, 1], [], []>} : vector<8x16xf32>, vector<8x16xf32>, vector<16x16xf32> -> vector<16x16xf32>
    %103 = tpu.iota {dimensions = array<i32: 0>} : vector<16x16xi32>
    %104 = tpu.iota {dimensions = array<i32: 1>} : vector<16x16xi32>
    %105 = arith.cmpi eq, %103, %104 : vector<16x16xi32>
    %106 = arith.extui %105 : vector<16x16xi1> to vector<16x16xi32>
    %107 = arith.sitofp %106 : vector<16x16xi32> to vector<16x16xf32>
    %cst_48 = arith.constant 1.000000e-03 : f32
    %108 = vector.broadcast %cst_48 : f32 to vector<16x16xf32>
    %109 = arith.mulf %108, %107 : vector<16x16xf32>
    %110 = arith.addf %102, %109 : vector<16x16xf32>
    %111 = tpu.iota {dimensions = array<i32: 0>} : vector<16x1xi32>
    %112 = tpu.iota {dimensions = array<i32: 1>} : vector<1x16xi32>
    %113 = tpu.iota {dimensions = array<i32: 0>} : vector<16x16xi32>
    %114 = tpu.iota {dimensions = array<i32: 1>} : vector<16x16xi32>
    %115 = arith.cmpi eq, %113, %114 : vector<16x16xi32>
    %116 = arith.extui %115 : vector<16x16xi1> to vector<16x16xi32>
    %117 = arith.sitofp %116 : vector<16x16xi32> to vector<16x16xf32>
    %c0_i32 = arith.constant 0 : i32
    %c16_i32 = arith.constant 16 : i32
    %118 = arith.addi %c0_i32, %c16_i32 : i32
    %c1_i32 = arith.constant 1 : i32
    %119:2 = scf.for %arg12 = %c0_i32 to %118 step %c1_i32 iter_args(%arg13 = %110, %arg14 = %117) -> (vector<16x16xf32>, vector<16x16xf32>)  : i32 {
      %161 = vector.broadcast %arg12 : i32 to vector<16x1xi32>
      %162 = arith.cmpi eq, %111, %161 : vector<16x1xi32>
      %163 = arith.extui %162 : vector<16x1xi1> to vector<16x1xi32>
      %164 = arith.sitofp %163 : vector<16x1xi32> to vector<16x1xf32>
      %165 = vector.broadcast %arg12 : i32 to vector<1x16xi32>
      %166 = arith.cmpi eq, %112, %165 : vector<1x16xi32>
      %167 = arith.extui %166 : vector<1x16xi1> to vector<1x16xi32>
      %168 = arith.sitofp %167 : vector<1x16xi32> to vector<1x16xf32>
      %169 = vector.broadcast %164 : vector<16x1xf32> to vector<16x16xf32>
      %170 = arith.mulf %arg13, %169 : vector<16x16xf32>
      %cst_71 = arith.constant dense<0.000000e+00> : vector<16xf32>
      %171 = vector.multi_reduction <add>, %170, %cst_71 [0] : vector<16x16xf32> to vector<16xf32>
      %172 = vector.shape_cast %171 : vector<16xf32> to vector<1x16xf32>
      %173 = vector.broadcast %164 : vector<16x1xf32> to vector<16x16xf32>
      %174 = arith.mulf %arg14, %173 : vector<16x16xf32>
      %cst_72 = arith.constant dense<0.000000e+00> : vector<16xf32>
      %175 = vector.multi_reduction <add>, %174, %cst_72 [0] : vector<16x16xf32> to vector<16xf32>
      %176 = vector.shape_cast %175 : vector<16xf32> to vector<1x16xf32>
      %177 = arith.mulf %172, %168 : vector<1x16xf32>
      %cst_73 = arith.constant dense<0.000000e+00> : vector<1xf32>
      %178 = vector.multi_reduction <add>, %177, %cst_73 [1] : vector<1x16xf32> to vector<1xf32>
      %179 = vector.shape_cast %178 : vector<1xf32> to vector<1x1xf32>
      %cst_74 = arith.constant 1.000000e+00 : f32
      %180 = vector.broadcast %cst_74 : f32 to vector<1x1xf32>
      %181 = arith.divf %180, %179 : vector<1x1xf32>
      %182 = vector.broadcast %181 : vector<1x1xf32> to vector<1x16xf32>
      %183 = arith.mulf %172, %182 : vector<1x16xf32>
      %184 = vector.broadcast %181 : vector<1x1xf32> to vector<1x16xf32>
      %185 = arith.mulf %176, %184 : vector<1x16xf32>
      %186 = vector.broadcast %168 : vector<1x16xf32> to vector<16x16xf32>
      %187 = arith.mulf %arg13, %186 : vector<16x16xf32>
      %cst_75 = arith.constant dense<0.000000e+00> : vector<16xf32>
      %188 = vector.multi_reduction <add>, %187, %cst_75 [1] : vector<16x16xf32> to vector<16xf32>
      %189 = vector.shape_cast %188 : vector<16xf32> to vector<16x1xf32>
      %190 = vector.broadcast %189 : vector<16x1xf32> to vector<16x16xf32>
      %191 = vector.broadcast %183 : vector<1x16xf32> to vector<16x16xf32>
      %192 = arith.mulf %190, %191 : vector<16x16xf32>
      %193 = arith.subf %arg13, %192 : vector<16x16xf32>
      %194 = vector.broadcast %164 : vector<16x1xf32> to vector<16x16xf32>
      %195 = vector.broadcast %183 : vector<1x16xf32> to vector<16x16xf32>
      %196 = arith.mulf %194, %195 : vector<16x16xf32>
      %197 = arith.addf %193, %196 : vector<16x16xf32>
      %198 = vector.broadcast %189 : vector<16x1xf32> to vector<16x16xf32>
      %199 = vector.broadcast %185 : vector<1x16xf32> to vector<16x16xf32>
      %200 = arith.mulf %198, %199 : vector<16x16xf32>
      %201 = arith.subf %arg14, %200 : vector<16x16xf32>
      %202 = vector.broadcast %164 : vector<16x1xf32> to vector<16x16xf32>
      %203 = vector.broadcast %185 : vector<1x16xf32> to vector<16x16xf32>
      %204 = arith.mulf %202, %203 : vector<16x16xf32>
      %205 = arith.addf %201, %204 : vector<16x16xf32>
      scf.yield %197, %205 : vector<16x16xf32>, vector<16x16xf32>
    }
    %c16_i32_49 = arith.constant 16 : i32
    %cst_50 = arith.constant dense<0.000000e+00> : vector<8x16xf32>
    %120 = tpu.matmul %101, %119#1, %cst_50 {dimension_numbers = #tpu.dot_dimension_numbers<[1], [0], [0], [1], [0, 0, 1, 1], [], []>} : vector<8x16xf32>, vector<16x16xf32>, vector<8x16xf32> -> vector<8x16xf32>
    %cst_51 = arith.constant dense<0.000000e+00> : vector<8x8xf32>
    %121 = tpu.matmul %120, %101, %cst_51 {dimension_numbers = #tpu.dot_dimension_numbers<[1], [1], [0], [0], [0, 0, 1, 0], [], []>} : vector<8x16xf32>, vector<8x16xf32>, vector<8x8xf32> -> vector<8x8xf32>
    %cst_52 = arith.constant 1.000000e+00 : f32
    %122 = vector.broadcast %cst_52 : f32 to vector<8x8xf32>
    %123 = arith.mulf %122, %121 : vector<8x8xf32>
    %c0_53 = arith.constant 0 : index
    %c0_54 = arith.constant 0 : index
    %124 = vector.load %arg2[%c0_53, %c0_54] : memref<8x4xf32, #tpu.memory_space<vmem>>, vector<8x4xf32>
    %cst_55 = arith.constant dense<0.000000e+00> : vector<4x4xf32>
    %125 = tpu.matmul %124, %124, %cst_55 {dimension_numbers = #tpu.dot_dimension_numbers<[0], [0], [1], [1], [0, 1, 1, 1], [], []>} : vector<8x4xf32>, vector<8x4xf32>, vector<4x4xf32> -> vector<4x4xf32>
    %cst_56 = arith.constant 3.000000e-01 : f32
    %126 = vector.broadcast %cst_56 : f32 to vector<4x4xf32>
    %127 = arith.mulf %126, %125 : vector<4x4xf32>
    %128 = tpu.iota {dimensions = array<i32: 0>} : vector<4x4xi32>
    %129 = tpu.iota {dimensions = array<i32: 1>} : vector<4x4xi32>
    %130 = arith.cmpi eq, %128, %129 : vector<4x4xi32>
    %131 = arith.extui %130 : vector<4x4xi1> to vector<4x4xi32>
    %132 = arith.sitofp %131 : vector<4x4xi32> to vector<4x4xf32>
    %cst_57 = arith.constant 1.000000e-03 : f32
    %133 = vector.broadcast %cst_57 : f32 to vector<4x4xf32>
    %134 = arith.mulf %133, %132 : vector<4x4xf32>
    %135 = arith.addf %127, %134 : vector<4x4xf32>
    %136 = tpu.iota {dimensions = array<i32: 0>} : vector<4x1xi32>
    %137 = tpu.iota {dimensions = array<i32: 1>} : vector<1x4xi32>
    %138 = tpu.iota {dimensions = array<i32: 0>} : vector<4x4xi32>
    %139 = tpu.iota {dimensions = array<i32: 1>} : vector<4x4xi32>
    %140 = arith.cmpi eq, %138, %139 : vector<4x4xi32>
    %141 = arith.extui %140 : vector<4x4xi1> to vector<4x4xi32>
    %142 = arith.sitofp %141 : vector<4x4xi32> to vector<4x4xf32>
    %c0_i32_58 = arith.constant 0 : i32
    %c4_i32 = arith.constant 4 : i32
    %143 = arith.addi %c0_i32_58, %c4_i32 : i32
    %c1_i32_59 = arith.constant 1 : i32
    %144:2 = scf.for %arg12 = %c0_i32_58 to %143 step %c1_i32_59 iter_args(%arg13 = %135, %arg14 = %142) -> (vector<4x4xf32>, vector<4x4xf32>)  : i32 {
      %161 = vector.broadcast %arg12 : i32 to vector<4x1xi32>
      %162 = arith.cmpi eq, %136, %161 : vector<4x1xi32>
      %163 = arith.extui %162 : vector<4x1xi1> to vector<4x1xi32>
      %164 = arith.sitofp %163 : vector<4x1xi32> to vector<4x1xf32>
      %165 = vector.broadcast %arg12 : i32 to vector<1x4xi32>
      %166 = arith.cmpi eq, %137, %165 : vector<1x4xi32>
      %167 = arith.extui %166 : vector<1x4xi1> to vector<1x4xi32>
      %168 = arith.sitofp %167 : vector<1x4xi32> to vector<1x4xf32>
      %169 = vector.broadcast %164 : vector<4x1xf32> to vector<4x4xf32>
      %170 = arith.mulf %arg13, %169 : vector<4x4xf32>
      %cst_71 = arith.constant dense<0.000000e+00> : vector<4xf32>
      %171 = vector.multi_reduction <add>, %170, %cst_71 [0] : vector<4x4xf32> to vector<4xf32>
      %172 = vector.shape_cast %171 : vector<4xf32> to vector<1x4xf32>
      %173 = vector.broadcast %164 : vector<4x1xf32> to vector<4x4xf32>
      %174 = arith.mulf %arg14, %173 : vector<4x4xf32>
      %cst_72 = arith.constant dense<0.000000e+00> : vector<4xf32>
      %175 = vector.multi_reduction <add>, %174, %cst_72 [0] : vector<4x4xf32> to vector<4xf32>
      %176 = vector.shape_cast %175 : vector<4xf32> to vector<1x4xf32>
      %177 = arith.mulf %172, %168 : vector<1x4xf32>
      %cst_73 = arith.constant dense<0.000000e+00> : vector<1xf32>
      %178 = vector.multi_reduction <add>, %177, %cst_73 [1] : vector<1x4xf32> to vector<1xf32>
      %179 = vector.shape_cast %178 : vector<1xf32> to vector<1x1xf32>
      %cst_74 = arith.constant 1.000000e+00 : f32
      %180 = vector.broadcast %cst_74 : f32 to vector<1x1xf32>
      %181 = arith.divf %180, %179 : vector<1x1xf32>
      %182 = vector.broadcast %181 : vector<1x1xf32> to vector<1x4xf32>
      %183 = arith.mulf %172, %182 : vector<1x4xf32>
      %184 = vector.broadcast %181 : vector<1x1xf32> to vector<1x4xf32>
      %185 = arith.mulf %176, %184 : vector<1x4xf32>
      %186 = vector.broadcast %168 : vector<1x4xf32> to vector<4x4xf32>
      %187 = arith.mulf %arg13, %186 : vector<4x4xf32>
      %cst_75 = arith.constant dense<0.000000e+00> : vector<4xf32>
      %188 = vector.multi_reduction <add>, %187, %cst_75 [1] : vector<4x4xf32> to vector<4xf32>
      %189 = vector.shape_cast %188 : vector<4xf32> to vector<4x1xf32>
      %190 = vector.broadcast %189 : vector<4x1xf32> to vector<4x4xf32>
      %191 = vector.broadcast %183 : vector<1x4xf32> to vector<4x4xf32>
      %192 = arith.mulf %190, %191 : vector<4x4xf32>
      %193 = arith.subf %arg13, %192 : vector<4x4xf32>
      %194 = vector.broadcast %164 : vector<4x1xf32> to vector<4x4xf32>
      %195 = vector.broadcast %183 : vector<1x4xf32> to vector<4x4xf32>
      %196 = arith.mulf %194, %195 : vector<4x4xf32>
      %197 = arith.addf %193, %196 : vector<4x4xf32>
      %198 = vector.broadcast %189 : vector<4x1xf32> to vector<4x4xf32>
      %199 = vector.broadcast %185 : vector<1x4xf32> to vector<4x4xf32>
      %200 = arith.mulf %198, %199 : vector<4x4xf32>
      %201 = arith.subf %arg14, %200 : vector<4x4xf32>
      %202 = vector.broadcast %164 : vector<4x1xf32> to vector<4x4xf32>
      %203 = vector.broadcast %185 : vector<1x4xf32> to vector<4x4xf32>
      %204 = arith.mulf %202, %203 : vector<4x4xf32>
      %205 = arith.addf %201, %204 : vector<4x4xf32>
      scf.yield %197, %205 : vector<4x4xf32>, vector<4x4xf32>
    }
    %c4_i32_60 = arith.constant 4 : i32
    %cst_61 = arith.constant dense<0.000000e+00> : vector<8x4xf32>
    %145 = tpu.matmul %124, %144#1, %cst_61 {dimension_numbers = #tpu.dot_dimension_numbers<[1], [0], [0], [1], [0, 0, 1, 1], [], []>} : vector<8x4xf32>, vector<4x4xf32>, vector<8x4xf32> -> vector<8x4xf32>
    %cst_62 = arith.constant dense<0.000000e+00> : vector<8x8xf32>
    %146 = tpu.matmul %145, %124, %cst_62 {dimension_numbers = #tpu.dot_dimension_numbers<[1], [1], [0], [0], [0, 0, 1, 0], [], []>} : vector<8x4xf32>, vector<8x4xf32>, vector<8x8xf32> -> vector<8x8xf32>
    %cst_63 = arith.constant 9.000000e-02 : f32
    %147 = vector.broadcast %cst_63 : f32 to vector<8x8xf32>
    %148 = arith.mulf %147, %146 : vector<8x8xf32>
    %149 = arith.addf %123, %148 : vector<8x8xf32>
    %150 = arith.truncf %149 : vector<8x8xf32> to vector<8x8xbf16>
    %c0_i32_64 = arith.constant 0 : i32
    %151 = arith.truncf %32 : vector<8x8xf32> to vector<8x8xbf16>
    %cst_65 = arith.constant dense<0.000000e+00> : vector<8x8xf32>
    %152 = tpu.matmul %150, %151, %cst_65 {dimension_numbers = #tpu.dot_dimension_numbers<[1], [0], [0], [1], [0, 0, 1, 1], [], []>} : vector<8x8xbf16>, vector<8x8xbf16>, vector<8x8xf32> -> vector<8x8xf32>
    %153 = math.tanh %152 : vector<8x8xf32>
    %c1_i32_66 = arith.constant 1 : i32
    %154 = arith.truncf %153 : vector<8x8xf32> to vector<8x8xbf16>
    %cst_67 = arith.constant dense<0.000000e+00> : vector<8x8xf32>
    %155 = tpu.matmul %150, %154, %cst_67 {dimension_numbers = #tpu.dot_dimension_numbers<[1], [0], [0], [1], [0, 0, 1, 1], [], []>} : vector<8x8xbf16>, vector<8x8xbf16>, vector<8x8xf32> -> vector<8x8xf32>
    %156 = math.tanh %155 : vector<8x8xf32>
    %c2_i32 = arith.constant 2 : i32
    %157 = arith.truncf %156 : vector<8x8xf32> to vector<8x8xbf16>
    %cst_68 = arith.constant dense<0.000000e+00> : vector<8x8xf32>
    %158 = tpu.matmul %150, %157, %cst_68 {dimension_numbers = #tpu.dot_dimension_numbers<[1], [0], [0], [1], [0, 0, 1, 1], [], []>} : vector<8x8xbf16>, vector<8x8xbf16>, vector<8x8xf32> -> vector<8x8xf32>
    %159 = math.tanh %158 : vector<8x8xf32>
    %c0_69 = arith.constant 0 : index
    %c0_70 = arith.constant 0 : index
    %160 = vector.load %arg11[%c0_69, %c0_70] : memref<8x8xf32, #tpu.memory_space<vmem>>, vector<8x8xf32>
    tpu.vector_store %arg11[%c0_69, %c0_70], %159 {strides = array<i32>} : memref<8x8xf32, #tpu.memory_space<vmem>>, vector<8x8xf32>,
    return
  }
  func.func @transform_0(%arg0: i32) -> (i32, i32) {
    %c0_i32 = arith.constant 0 : i32
    %c0_i32_0 = arith.constant 0 : i32
    %c0_i32_1 = arith.constant 0 : i32
    return %c0_i32, %c0_i32_0 : i32, i32
  }
  func.func @transform_1(%arg0: i32) -> (i32, i32) {
    %c0_i32 = arith.constant 0 : i32
    %c0_i32_0 = arith.constant 0 : i32
    %c0_i32_1 = arith.constant 0 : i32
    return %c0_i32, %c0_i32_0 : i32, i32
  }
  func.func @transform_2(%arg0: i32) -> (i32, i32) {
    %c0_i32 = arith.constant 0 : i32
    %c0_i32_0 = arith.constant 0 : i32
    %c0_i32_1 = arith.constant 0 : i32
    return %c0_i32, %c0_i32_0 : i32, i32
  }
  func.func @transform_3(%arg0: i32) -> (i32, i32) {
    %c0_i32 = arith.constant 0 : i32
    %c0_i32_0 = arith.constant 0 : i32
    %c0_i32_1 = arith.constant 0 : i32
    return %c0_i32, %c0_i32_0 : i32, i32
  }
  func.func @transform_4(%arg0: i32) -> (i32, i32) {
    %c0_i32 = arith.constant 0 : i32
    %c0_i32_0 = arith.constant 0 : i32
    %c0_i32_1 = arith.constant 0 : i32
    return %c0_i32, %c0_i32_0 : i32, i32
  }
  func.func @transform_5(%arg0: i32) -> (i32, i32) {
    %c0_i32 = arith.constant 0 : i32
    %c0_i32_0 = arith.constant 0 : i32
    %c0_i32_1 = arith.constant 0 : i32
    return %c0_i32, %c0_i32_0 : i32, i32
  }
  func.func @transform_6(%arg0: i32) -> (i32, i32) {
    %c0_i32 = arith.constant 0 : i32
    %c0_i32_0 = arith.constant 0 : i32
    %c0_i32_1 = arith.constant 0 : i32
    return %c0_i32, %c0_i32_0 : i32, i32
  }
  func.func @transform_7(%arg0: i32) -> (i32, i32) {
    %c0_i32 = arith.constant 0 : i32
    %c0_i32_0 = arith.constant 0 : i32
    %c0_i32_1 = arith.constant 0 : i32
    return %c0_i32, %c0_i32_0 : i32, i32
  }
  func.func @transform_8(%arg0: i32) -> (i32, i32) {
    %c0_i32 = arith.constant 0 : i32
    %c0_i32_0 = arith.constant 0 : i32
    %c0_i32_1 = arith.constant 0 : i32
    return %c0_i32, %c0_i32_0 : i32, i32
  }
  func.func @transform_9(%arg0: i32) -> (i32, i32) {
    %c0_i32 = arith.constant 0 : i32
    %c0_i32_0 = arith.constant 0 : i32
    %c0_i32_1 = arith.constant 0 : i32
    return %c0_i32, %c0_i32_0 : i32, i32
  }
  func.func @transform_10(%arg0: i32) -> (i32, i32) {
    %c0_i32 = arith.constant 0 : i32
    %c0_i32_0 = arith.constant 0 : i32
    %c0_i32_1 = arith.constant 0 : i32
    return %c0_i32, %c0_i32_0 : i32, i32
  }
}

</mosaic_0001>

<llo_original>
// kernel: _forward_impl.1
$region0: #{_forward_impl.1}
  #allocation0 [shape = 'u32[]', space=smem, size = 0x4, offset = 0x4, fixed_abs, tag = 'smem constant byte address 0x4 - core index']
  #allocation1 [shape = 'u32[72,128]{1,0:T(1,128)}', space=vmem, size = 0x9000, scoped, tag = 'internal scratch']
  %s0 = inlined_call_operand.hbm [shape: f32[8,32], index: 0, kind: input, shape index: {}]
  %s1 = inlined_call_operand.vmem [shape: f32[8,4], index: 1, kind: input, shape index: {}]
  %s2 = inlined_call_operand.hbm [shape: bf16[32,8], index: 2, kind: input, shape index: {}]
  %s3 = inlined_call_operand.hbm [shape: f32[3,8], index: 3, kind: input, shape index: {}]
  %s4 = inlined_call_operand.hbm [shape: bf16[32,64], index: 4, kind: input, shape index: {}]
  %s5 = inlined_call_operand.hbm [shape: f32[3,64], index: 5, kind: input, shape index: {}]
  %s6 = inlined_call_operand.hbm [shape: bf16[64,32], index: 6, kind: input, shape index: {}]
  %s7 = inlined_call_operand.hbm [shape: f32[3,32], index: 7, kind: input, shape index: {}]
  %s8 = inlined_call_operand.vmem [shape: bf16[32,16], index: 8, kind: input, shape index: {}]
  %s9 = inlined_call_operand.vmem [shape: f32[1,16], index: 9, kind: input, shape index: {}]
  %s10 = inlined_call_operand.hbm [shape: f32[8,8], index: 10, kind: output, shape index: {}]
  %s11 = sld [smem:[#allocation0]]
  $region92: #{_forward_impl.1} parent=0
    _
  %s13 = ssub.s32 1, %s11
  %s14 = scalar_select 0, %s13, %s11
  $region1: #{_forward_impl.1} parent=0
    #allocation2 [shape = 'u8[4096]{0}', space=vmem, size = 0x1000, scoped, tag = 'input window, operand 0, single buffered']
    #allocation3 [shape = 's32[1]{0}', space=sflag, size = 0x4, scoped, tag = 'scoped memory for _forward_impl.1']
    #allocation4 [shape = 's32[1]{0}', space=sflag, size = 0x4, scoped, tag = 'scoped memory for _forward_impl.1']
    #allocation5 [shape = 'u8[8192]{0}', space=vmem, size = 0x2000, scoped, tag = 'input window, operand 2, single buffered']
    #allocation6 [shape = 's32[1]{0}', space=sflag, size = 0x4, scoped, tag = 'scoped memory for _forward_impl.1']
    #allocation7 [shape = 'u8[2048]{0}', space=vmem, size = 0x800, scoped, tag = 'input window, operand 3, single buffered']
    #allocation8 [shape = 'u8[8192]{0}', space=vmem, size = 0x2000, scoped, tag = 'input window, operand 4, single buffered']
    #allocation9 [shape = 's32[1]{0}', space=sflag, size = 0x4, scoped, tag = 'scoped memory for _forward_impl.1']
    #allocation10 [shape = 'u8[2048]{0}', space=vmem, size = 0x800, scoped, tag = 'input window, operand 5, single buffered']
    #allocation11 [shape = 'u8[16384]{0}', space=vmem, size = 0x4000, scoped, tag = 'input window, operand 6, single buffered']
    #allocation12 [shape = 's32[1]{0}', space=sflag, size = 0x4, scoped, tag = 'scoped memory for _forward_impl.1']
    #allocation13 [shape = 'u8[2048]{0}', space=vmem, size = 0x800, scoped, tag = 'input window, operand 7, single buffered']
    #allocation14 [shape = 'u8[4096]{0}', space=vmem, size = 0x1000, scoped, tag = 'output window, operand 0, single buffered']
    %15 = vsyncpa [#allocation3], 0
    %16 = vsyncpa [#allocation6], 0
    %17 = vsyncpa [#allocation9], 0
    %18 = vsyncpa [#allocation12], 0
    %19 = vsyncpa [#allocation4], 0
    // Predicated region
    $region2: #{_forward_impl.1} parent=1 // pred_check
      _
    $region3: #{_forward_impl.1} parent=1 // pred_check_branch
      %21 = sbr.rel (0) target = $region5
    $region4: #{_forward_impl.1} parent=1 // pred_region
      %23 = vsyncadd [#allocation3], 0
      %s25 = sshll.u32 %s0, 4
      %s26 = int_to_ptr.hbm [resolvable:$true] %s25
      %s27 = sshll.u32 [#allocation2], 4
      %s28 = int_to_ptr.vmem [resolvable:$true] %s27
      %30 = dma.hbm_to_vmem [thread:$0]  %s26, 128, %s28, [#allocation3]
    $region5: #{_forward_impl.1} parent=1 // pred_fallthru
      _
    // Predicated region
    $region6: #{_forward_impl.1} parent=1 // pred_check
      _
    $region7: #{_forward_impl.1} parent=1 // pred_check_branch
      %32 = sbr.rel (0) target = $region9
    $region8: #{_forward_impl.1} parent=1 // pred_region
      _
    $region9: #{_forward_impl.1} parent=1 // pred_fallthru
      _
    // Predicated region
    $region10: #{_forward_impl.1} parent=1 // pred_check
      _
    $region11: #{_forward_impl.1} parent=1 // pred_check_branch
      %34 = sbr.rel (0) target = $region13
    $region12: #{_forward_impl.1} parent=1 // pred_region
      %36 = vsyncadd [#allocation6], 0
      %s37 = sshll.u32 %s2, 4
      %s38 = int_to_ptr.hbm [resolvable:$true] %s37
      %s39 = sshll.u32 [#allocation5], 4
      %s40 = int_to_ptr.vmem [resolvable:$true] %s39
      %45 = dma.hbm_to_vmem [thread:$0]  %s38, 256, %s40, [#allocation6], 64, 64, 4
    $region13: #{_forward_impl.1} parent=1 // pred_fallthru
      _
    // Predicated region
    $region14: #{_forward_impl.1} parent=1 // pred_check
      _
    $region15: #{_forward_impl.1} parent=1 // pred_check_branch
      %47 = sbr.rel (0) target = $region17
    $region16: #{_forward_impl.1} parent=1 // pred_region
      %49 = vsyncadd [#allocation6], 0
      %s51 = sshll.u32 %s3, 4
      %s52 = int_to_ptr.hbm [resolvable:$true] %s51
      %s53 = sshll.u32 [#allocation7], 4
      %s54 = int_to_ptr.vmem [resolvable:$true] %s53
      %56 = dma.hbm_to_vmem [thread:$0]  %s52, 64, %s54, [#allocation6]
    $region17: #{_forward_impl.1} parent=1 // pred_fallthru
      _
    // Predicated region
    $region18: #{_forward_impl.1} parent=1 // pred_check
      _
    $region19: #{_forward_impl.1} parent=1 // pred_check_branch
      %58 = sbr.rel (0) target = $region21
    $region20: #{_forward_impl.1} parent=1 // pred_region
      %60 = vsyncadd [#allocation9], 0
      %s61 = sshll.u32 %s4, 4
      %s62 = int_to_ptr.hbm [resolvable:$true] %s61
      %s63 = sshll.u32 [#allocation8], 4
      %s64 = int_to_ptr.vmem [resolvable:$true] %s63
      %69 = dma.hbm_to_vmem [thread:$0]  %s62, 256, %s64, [#allocation9], 64, 64, 4
    $region21: #{_forward_impl.1} parent=1 // pred_fallthru
      _
    // Predicated region
    $region22: #{_forward_impl.1} parent=1 // pred_check
      _
    $region23: #{_forward_impl.1} parent=1 // pred_check_branch
      %71 = sbr.rel (0) target = $region25
    $region24: #{_forward_impl.1} parent=1 // pred_region
      %73 = vsyncadd [#allocation9], 0
      %s75 = sshll.u32 %s5, 4
      %s76 = int_to_ptr.hbm [resolvable:$true] %s75
      %s77 = sshll.u32 [#allocation10], 4
      %s78 = int_to_ptr.vmem [resolvable:$true] %s77
      %80 = dma.hbm_to_vmem [thread:$0]  %s76, 64, %s78, [#allocation9]
    $region25: #{_forward_impl.1} parent=1 // pred_fallthru
      _
    // Predicated region
    $region26: #{_forward_impl.1} parent=1 // pred_check
      _
    $region27: #{_forward_impl.1} parent=1 // pred_check_branch
      %82 = sbr.rel (0) target = $region29
    $region28: #{_forward_impl.1} parent=1 // pred_region
      %84 = vsyncadd [#allocation12], 0
      %s85 = sshll.u32 %s6, 4
      %s86 = int_to_ptr.hbm [resolvable:$true] %s85
      %s87 = sshll.u32 [#allocation11], 4
      %s88 = int_to_ptr.vmem [resolvable:$true] %s87
      %93 = dma.hbm_to_vmem [thread:$0]  %s86, 512, %s88, [#allocation12], 64, 64, 4
    $region29: #{_forward_impl.1} parent=1 // pred_fallthru
      _
    // Predicated region
    $region30: #{_forward_impl.1} parent=1 // pred_check
      _
    $region31: #{_forward_impl.1} parent=1 // pred_check_branch
      %95 = sbr.rel (0) target = $region33
    $region32: #{_forward_impl.1} parent=1 // pred_region
      %97 = vsyncadd [#allocation12], 0
      %s99 = sshll.u32 %s7, 4
      %s100 = int_to_ptr.hbm [resolvable:$true] %s99
      %s101 = sshll.u32 [#allocation13], 4
      %s102 = int_to_ptr.vmem [resolvable:$true] %s101
      %104 = dma.hbm_to_vmem [thread:$0]  %s100, 64, %s102, [#allocation12]
    $region33: #{_forward_impl.1} parent=1 // pred_fallthru
      _
    // Predicated region
    $region34: #{_forward_impl.1} parent=1 // pred_check
      _
    $region35: #{_forward_impl.1} parent=1 // pred_check_branch
      %106 = sbr.rel (0) target = $region37
    $region36: #{_forward_impl.1} parent=1 // pred_region
      _
    $region37: #{_forward_impl.1} parent=1 // pred_fallthru
      _
    // Predicated region
    $region38: #{_forward_impl.1} parent=1 // pred_check
      _
    $region39: #{_forward_impl.1} parent=1 // pred_check_branch
      %108 = sbr.rel (0) target = $region41
    $region40: #{_forward_impl.1} parent=1 // pred_region
      _
    $region41: #{_forward_impl.1} parent=1 // pred_fallthru
      _
    // Predicated region
    $region42: #{_forward_impl.1} parent=1 // pred_check
      _
    $region43: #{_forward_impl.1} parent=1 // pred_check_branch
      %110 = sbr.rel (0) target = $region45
    $region44: #{_forward_impl.1} parent=1 // pred_region
      %112 = dma.done [#allocation3], 128
    $region45: #{_forward_impl.1} parent=1 // pred_fallthru
      _
    // Predicated region
    $region46: #{_forward_impl.1} parent=1 // pred_check
      _
    $region47: #{_forward_impl.1} parent=1 // pred_check_branch
      %114 = sbr.rel (0) target = $region49
    $region48: #{_forward_impl.1} parent=1 // pred_region
      %116 = dma.done [#allocation6], 256
    $region49: #{_forward_impl.1} parent=1 // pred_fallthru
      _
    // Predicated region
    $region50: #{_forward_impl.1} parent=1 // pred_check
      _
    $region51: #{_forward_impl.1} parent=1 // pred_check_branch
      %118 = sbr.rel (0) target = $region53
    $region52: #{_forward_impl.1} parent=1 // pred_region
      %120 = dma.done [#allocation6], 64
    $region53: #{_forward_impl.1} parent=1 // pred_fallthru
      _
    // Predicated region
    $region54: #{_forward_impl.1} parent=1 // pred_check
      _
    $region55: #{_forward_impl.1} parent=1 // pred_check_branch
      %122 = sbr.rel (0) target = $region57
    $region56: #{_forward_impl.1} parent=1 // pred_region
      %124 = dma.done [#allocation9], 256
    $region57: #{_forward_impl.1} parent=1 // pred_fallthru
      _
    // Predicated region
    $region58: #{_forward_impl.1} parent=1 // pred_check
      _
    $region59: #{_forward_impl.1} parent=1 // pred_check_branch
      %126 = sbr.rel (0) target = $region61
    $region60: #{_forward_impl.1} parent=1 // pred_region
      %128 = dma.done [#allocation9], 64
    $region61: #{_forward_impl.1} parent=1 // pred_fallthru
      _
    // Predicated region
    $region62: #{_forward_impl.1} parent=1 // pred_check
      _
    $region63: #{_forward_impl.1} parent=1 // pred_check_branch
      %130 = sbr.rel (0) target = $region65
    $region64: #{_forward_impl.1} parent=1 // pred_region
      %132 = dma.done [#allocation12], 512
    $region65: #{_forward_impl.1} parent=1 // pred_fallthru
      _
    // Predicated region
    $region66: #{_forward_impl.1} parent=1 // pred_check
      _
    $region67: #{_forward_impl.1} parent=1 // pred_check_branch
      %134 = sbr.rel (0) target = $region69
    $region68: #{_forward_impl.1} parent=1 // pred_region
      %136 = dma.done [#allocation12], 64
    $region69: #{_forward_impl.1} parent=1 // pred_fallthru
      _
    %v138 = vld [vmem:[#allocation2] sm:$0xff]
    %v139 = vpack.c.bf16 %v138, %v138
    %v140 = vld [vmem:[#allocation5] sm:$0xf]
    %v141 = vld [vmem:[#allocation5 + $0x4] sm:$0xf]
    %v142 = vld [vmem:[#allocation5 + $0x8] sm:$0xf]
    %v143 = vld [vmem:[#allocation5 + $0xc] sm:$0xf]
    %v144 = vld [vmem:[#allocation7] sm:$0x1]
    %v145 = vperm.slane %v144, 0
    %v150 = vunpack.c.l.b16 %v140
    %v151 = vunpack.c.l.b16 %v141
    %v152 = vunpack.c.l.b16 %v142
    %v153 = vunpack.c.l.b16 %v143
    %v154 = vpack.c.b16 %v151, %v150
    %v155 = vpack.c.b16 %v153, %v152
    %vm158 = vcmask 261120
    %v160 = vsel %vm158, %v139, 0
    %162 = vmatpush.bf16.msra.mxu0 0
    %163 = vmatpush.bf16.msra.mxu0 0
    %164 = vmatpush.bf16.msra.mxu0 0
    %165 = vmatpush.bf16.msra.mxu0 0
    %166 = vmatpush.bf16.msra.mxu0 0
    %167 = vmatpush.bf16.msra.mxu0 0
    %168 = vmatpush.bf16.msra.mxu0 %v155
    %169 = vmatpush.bf16.msra.mxu0 %v154
    %170 = vmatmul.bf16.gmra.mxu0 %v160
    %v171 = vpop.f32.mrf.mxu0
    %v172 = vadd.f32 %v145, %v171
    %v173 = vpop.f32.mrf.mxu0
    %174 = vdwg.mxu0
    %v175 = vld [vmem:[#allocation7 + $0x1] sm:$0x1]
    %v176 = vld [vmem:[#allocation7 + $0x2] sm:$0x1]
    %vm177 = vcmask 64512
    %v178 = vsel %vm177, %v172, 0.0
    %v179 = vrot.slane %v178, 4
    %v180 = vadd.f32 %v178, %v179
    %v181 = vrot.slane %v180, 2
    %v182 = vadd.f32 %v180, %v181
    %v183 = vrot.slane %v182, 1
    %v184 = vadd.f32 %v182, %v183
    %v185 = vrcp.pop 8.0
    %v186 = vmul.f32 8.0, %v185
    %v187 = vsub.f32 1.0, %v186
    %v188 = vmul.f32 %v185, %v187
    %v189 = vadd.f32 %v185, %v188
    %vm190 = vweird.f32 %v185
    %v191 = vsel %vm190, %v185, %v189
    %v192 = vmul.f32 %v184, %v191
    %v193 = vsub.f32 %v172, %v192
    %v194 = vmul.f32 %v193, %v193
    %v195 = vsel %vm177, %v194, 0.0
    %v196 = vrot.slane %v195, 4
    %v197 = vadd.f32 %v195, %v196
    %v198 = vrot.slane %v197, 2
    %v199 = vadd.f32 %v197, %v198
    %v200 = vrot.slane %v199, 1
    %v201 = vadd.f32 %v199, %v200
    %v202 = vmul.f32 %v201, %v191
    %v203 = vadd.f32 %v202, 1e-05
    %v204 = vrsqrt.pop %v203
    %v205 = vmul.f32 %v204, %v203
    %v206 = vmul.f32 %v205, %v204
    %v207 = vmul.f32 0.5, %v206
    %v208 = vsub.f32 1.5, %v207
    %v209 = vmul.f32 %v204, %v208
    %vm210 = vweird.f32 %v203
    %vm211 = vweird.f32 %v204
    %vm212 = vmor %vm210, %vm211
    %v213 = vsel %vm212, %v204, %v209
    %v214 = vmul.f32 %v193, %v213
    %v215 = vperm.slane %v175, 0
    %v216 = vmul.f32 %v214, %v215
    %v217 = vperm.slane %v176, 0
    %v218 = vadd.f32 %v216, %v217
    %v219 = vtanh.pop %v218
    %220 = vxpose.xlu0.b32.start [1/16] %v219, 128
    %221 = vxpose.xlu0.b32.cont [2/16] 0.0, 128
    %222 = vxpose.xlu0.b32.cont [3/16] 0.0, 128
    %223 = vxpose.xlu0.b32.cont [4/16] 0.0, 128
    %224 = vxpose.xlu0.b32.cont [5/16] 0.0, 128
    %225 = vxpose.xlu0.b32.cont [6/16] 0.0, 128
    %226 = vxpose.xlu0.b32.cont [7/16] 0.0, 128
    %227 = vxpose.xlu0.b32.cont [8/16] 0.0, 128
    %228 = vxpose.xlu0.b32.cont [9/16] 0.0, 128
    %229 = vxpose.xlu0.b32.cont [10/16] 0.0, 128
    %230 = vxpose.xlu0.b32.cont [11/16] 0.0, 128
    %231 = vxpose.xlu0.b32.cont [12/16] 0.0, 128
    %232 = vxpose.xlu0.b32.cont [13/16] 0.0, 128
    %233 = vxpose.xlu0.b32.cont [14/16] 0.0, 128
    %234 = vxpose.xlu0.b32.cont [15/16] 0.0, 128
    %235 = vxpose.xlu0.b32.end [16/16] 0.0, 128
    %v236 = vpop.trf.xlu0
    %v237 = vpop.trf.xlu0
    %v238 = vpop.trf.xlu0
    %v239 = vpop.trf.xlu0
    %v240 = vpop.trf.xlu0
    %v241 = vpop.trf.xlu0
    %v242 = vpop.trf.xlu0
    %v243 = vpop.trf.xlu0
    %v244 = vpop.trf.xlu0
    %v245 = vpop.trf.xlu0
    %v246 = vpop.trf.xlu0
    %v247 = vpop.trf.xlu0
    %v248 = vpop.trf.xlu0
    %v249 = vpop.trf.xlu0
    %v250 = vpop.trf.xlu0
    %v251 = vpop.trf.xlu0
    %v252 = vld [vmem:[#allocation8] sm:$0xf]
    %v253 = vld [vmem:[#allocation8 + $0x4] sm:$0xf]
    %v254 = vld [vmem:[#allocation8 + $0x8] sm:$0xf]
    %v255 = vld [vmem:[#allocation8 + $0xc] sm:$0xf]
    %v256 = vld [vmem:[#allocation10] sm:$0x1]
    %v257 = vperm.slane %v256, 0
    %v262 = vunpack.c.l.b16 %v252
    %v263 = vunpack.c.l.b16 %v253
    %v264 = vunpack.c.l.b16 %v254
    %v265 = vunpack.c.l.b16 %v255
    %v266 = vpack.c.b16 %v263, %v262
    %v267 = vpack.c.b16 %v265, %v264
    %270 = vmatpush.bf16.msra.mxu0 0
    %271 = vmatpush.bf16.msra.mxu0 0
    %272 = vmatpush.bf16.msra.mxu0 0
    %273 = vmatpush.bf16.msra.mxu0 0
    %274 = vmatpush.bf16.msra.mxu0 0
    %275 = vmatpush.bf16.msra.mxu0 0
    %276 = vmatpush.bf16.msra.mxu0 %v267
    %277 = vmatpush.bf16.msra.mxu0 %v266
    %278 = vmatmul.bf16.gmra.mxu0 %v160
    %v279 = vpop.f32.mrf.mxu0
    %v280 = vadd.f32 %v257, %v279
    %v281 = vpop.f32.mrf.mxu0
    %282 = vdwg.mxu0
    %v283 = vld [vmem:[#allocation10 + $0x1] sm:$0x1]
    %v284 = vld [vmem:[#allocation10 + $0x2] sm:$0x1]
    %vm285 = vcmask 523264
    %v286 = vsel %vm285, %v280, 0.0
    %v287 = vrot.slane %v286, 4
    %v288 = vadd.f32 %v286, %v287
    %v289 = vrot.slane %v288, 2
    %v290 = vadd.f32 %v288, %v289
    %v291 = vrot.slane %v290, 1
    %v292 = vadd.f32 %v290, %v291
    %v293 = vmul.f32 %v292, %v191
    %v294 = vsub.f32 %v280, %v293
    %v295 = vmul.f32 %v294, %v294
    %v296 = vsel %vm285, %v295, 0.0
    %v297 = vrot.slane %v296, 4
    %v298 = vadd.f32 %v296, %v297
    %v299 = vrot.slane %v298, 2
    %v300 = vadd.f32 %v298, %v299
    %v301 = vrot.slane %v300, 1
    %v302 = vadd.f32 %v300, %v301
    %v303 = vmul.f32 %v302, %v191
    %v304 = vadd.f32 %v303, 1e-05
    %v305 = vrsqrt.pop %v304
    %v306 = vmul.f32 %v305, %v304
    %v307 = vmul.f32 %v306, %v305
    %v308 = vmul.f32 0.5, %v307
    %v309 = vsub.f32 1.5, %v308
    %v310 = vmul.f32 %v305, %v309
    %vm311 = vweird.f32 %v304
    %vm312 = vweird.f32 %v305
    %vm313 = vmor %vm311, %vm312
    %v314 = vsel %vm313, %v305, %v310
    %v315 = vmul.f32 %v294, %v314
    %v316 = vperm.slane %v283, 0
    %v317 = vmul.f32 %v315, %v316
    %v318 = vperm.slane %v284, 0
    %v319 = vadd.f32 %v317, %v318
    %v320 = vmax.f32 %v319, 0.0
    %v321 = vpack.c.bf16 %v320, %v320
    %v322 = vld [vmem:[#allocation11] sm:$0xf]
    %v323 = vld [vmem:[#allocation11 + $0x4] sm:$0xf]
    %v324 = vld [vmem:[#allocation11 + $0x8] sm:$0xf]
    %v325 = vld [vmem:[#allocation11 + $0xc] sm:$0xf]
    %v326 = vld [vmem:[#allocation11 + $0x10] sm:$0xf]
    %v327 = vld [vmem:[#allocation11 + $0x14] sm:$0xf]
    %v328 = vld [vmem:[#allocation11 + $0x18] sm:$0xf]
    %v329 = vld [vmem:[#allocation11 + $0x1c] sm:$0xf]
    %v330 = vld [vmem:[#allocation13] sm:$0x1]
    %v331 = vperm.slane %v330, 0
    %v340 = vunpack.c.l.b16 %v322
    %v341 = vunpack.c.l.b16 %v323
    %v342 = vunpack.c.l.b16 %v324
    %v343 = vunpack.c.l.b16 %v325
    %v344 = vunpack.c.l.b16 %v326
    %v345 = vunpack.c.l.b16 %v327
    %v346 = vunpack.c.l.b16 %v328
    %v347 = vunpack.c.l.b16 %v329
    %v348 = vpack.c.b16 %v341, %v340
    %v349 = vpack.c.b16 %v343, %v342
    %v350 = vpack.c.b16 %v345, %v344
    %v351 = vpack.c.b16 %v347, %v346
    %v357 = vsel %vm285, %v321, 0
    %359 = vmatpush.bf16.msra.mxu0 0
    %360 = vmatpush.bf16.msra.mxu0 0
    %361 = vmatpush.bf16.msra.mxu0 0
    %362 = vmatpush.bf16.msra.mxu0 0
    %363 = vmatpush.bf16.msra.mxu0 %v351
    %364 = vmatpush.bf16.msra.mxu0 %v350
    %365 = vmatpush.bf16.msra.mxu0 %v349
    %366 = vmatpush.bf16.msra.mxu0 %v348
    %367 = vmatmul.bf16.gmra.mxu0 %v357
    %v368 = vpop.f32.mrf.mxu0
    %v369 = vadd.f32 %v331, %v368
    %v370 = vpop.f32.mrf.mxu0
    %371 = vdwg.mxu0
    %v372 = vld [vmem:[#allocation13 + $0x1] sm:$0x1]
    %v373 = vld [vmem:[#allocation13 + $0x2] sm:$0x1]
    %v374 = vsel %vm158, %v369, 0.0
    %v375 = vrot.slane %v374, 4
    %v376 = vadd.f32 %v374, %v375
    %v377 = vrot.slane %v376, 2
    %v378 = vadd.f32 %v376, %v377
    %v379 = vrot.slane %v378, 1
    %v380 = vadd.f32 %v378, %v379
    %v381 = vmul.f32 %v380, %v191
    %v382 = vsub.f32 %v369, %v381
    %v383 = vmul.f32 %v382, %v382
    %v384 = vsel %vm158, %v383, 0.0
    %v385 = vrot.slane %v384, 4
    %v386 = vadd.f32 %v384, %v385
    %v387 = vrot.slane %v386, 2
    %v388 = vadd.f32 %v386, %v387
    %v389 = vrot.slane %v388, 1
    %v390 = vadd.f32 %v388, %v389
    %v391 = vmul.f32 %v390, %v191
    %v392 = vadd.f32 %v391, 1e-05
    %v393 = vrsqrt.pop %v392
    %v394 = vmul.f32 %v393, %v392
    %v395 = vmul.f32 %v394, %v393
    %v396 = vmul.f32 0.5, %v395
    %v397 = vsub.f32 1.5, %v396
    %v398 = vmul.f32 %v393, %v397
    %vm399 = vweird.f32 %v392
    %vm400 = vweird.f32 %v393
    %vm401 = vmor %vm399, %vm400
    %v402 = vsel %vm401, %v393, %v398
    %v403 = vmul.f32 %v382, %v402
    %v404 = vperm.slane %v372, 0
    %v405 = vmul.f32 %v403, %v404
    %v406 = vperm.slane %v373, 0
    %v407 = vadd.f32 %v405, %v406
    %v408 = vmax.f32 %v407, 0.0
    %v409 = vpack.c.bf16 %v408, %v408
    %v410 = vld [vmem:[%s8] sm:$0xf]
    %v411 = vld [vmem:[%s8 + $0x4] sm:$0xf]
    %v412 = vld [vmem:[%s8 + $0x8] sm:$0xf]
    %v413 = vld [vmem:[%s8 + $0xc] sm:$0xf]
    %v414 = vld [vmem:[%s9] sm:$0x1]
    %v416 = vperm.slane %v414, 0
    %v422 = vunpack.c.l.b16 %v410
    %v423 = vunpack.c.l.b16 %v411
    %v424 = vunpack.c.l.b16 %v412
    %v425 = vunpack.c.l.b16 %v413
    %v426 = vpack.c.b16 %v423, %v422
    %v427 = vpack.c.b16 %v425, %v424
    %v431 = vsel %vm158, %v409, 0
    %433 = vmatpush.bf16.msra.mxu0 0
    %434 = vmatpush.bf16.msra.mxu0 0
    %435 = vmatpush.bf16.msra.mxu0 0
    %436 = vmatpush.bf16.msra.mxu0 0
    %437 = vmatpush.bf16.msra.mxu0 0
    %438 = vmatpush.bf16.msra.mxu0 0
    %439 = vmatpush.bf16.msra.mxu0 %v427
    %440 = vmatpush.bf16.msra.mxu0 %v426
    %441 = vmatmul.bf16.gmra.mxu0 %v431
    %v442 = vpop.f32.mrf.mxu0
    %v443 = vadd.f32 %v416, %v442
    %v444 = vpop.f32.mrf.mxu0
    %445 = vdwg.mxu0
    %v446 = vlaneseq
    %v447 = vshrl.u32 %v446, 7
    %v448 = vadd.s32 %v447, 8
    %v449 = vlaneseq
    %v450 = vand.u32 %v449, 127
    %vm451 = vcmp.eq.s32.totalorder %v447, %v450
    %vm452 = vcmp.eq.s32.totalorder %v448, %v450
    %v453 = vsel %vm451, 1, 0
    %v454 = vsel %vm452, 1, 0
    %v455 = vcvt.s32.f32 %v453
    %v456 = vcvt.s32.f32 %v454
    %v457 = vmul.f32 %v455, 0.001
    %v458 = vmul.f32 %v456, 0.001
    %459 = vxpose.xlu0.b32.start [1/16] %v443, 128
    %460 = vxpose.xlu0.b32.cont [2/16] 0.0, 128
    %461 = vxpose.xlu0.b32.cont [3/16] 0.0, 128
    %462 = vxpose.xlu0.b32.cont [4/16] 0.0, 128
    %463 = vxpose.xlu0.b32.cont [5/16] 0.0, 128
    %464 = vxpose.xlu0.b32.cont [6/16] 0.0, 128
    %465 = vxpose.xlu0.b32.cont [7/16] 0.0, 128
    %466 = vxpose.xlu0.b32.cont [8/16] 0.0, 128
    %467 = vxpose.xlu0.b32.cont [9/16] 0.0, 128
    %468 = vxpose.xlu0.b32.cont [10/16] 0.0, 128
    %469 = vxpose.xlu0.b32.cont [11/16] 0.0, 128
    %470 = vxpose.xlu0.b32.cont [12/16] 0.0, 128
    %471 = vxpose.xlu0.b32.cont [13/16] 0.0, 128
    %472 = vxpose.xlu0.b32.cont [14/16] 0.0, 128
    %473 = vxpose.xlu0.b32.cont [15/16] 0.0, 128
    %474 = vxpose.xlu0.b32.end [16/16] 0.0, 128
    %v475 = vpop.trf.xlu0
    %v476 = vpop.trf.xlu0
    %v477 = vpop.trf.xlu0
    %v478 = vpop.trf.xlu0
    %v479 = vpop.trf.xlu0
    %v480 = vpop.trf.xlu0
    %v481 = vpop.trf.xlu0
    %v482 = vpop.trf.xlu0
    %v483 = vpop.trf.xlu0
    %v484 = vpop.trf.xlu0
    %v485 = vpop.trf.xlu0
    %v486 = vpop.trf.xlu0
    %v487 = vpop.trf.xlu0
    %v488 = vpop.trf.xlu0
    %v489 = vpop.trf.xlu0
    %v490 = vpop.trf.xlu0
    %v492 = vsel %vm177, %v475, 0
    %v495 = vsel %vm177, %v476, 0
    %497 = vmatpush.msra.mxu0 0.0
    %498 = vmatpush.msra.mxu0 0.0
    %499 = vmatpush.msra.mxu0 0.0
    %500 = vmatpush.msra.mxu0 0.0
    %501 = vmatpush.msra.mxu0 0.0
    %502 = vmatpush.msra.mxu0 0.0
    %503 = vmatpush.msra.mxu0 0.0
    %504 = vmatpush.msra.mxu0 0.0
    %505 = vmatpush.msra.mxu0 0.0
    %506 = vmatpush.msra.mxu0 0.0
    %507 = vmatpush.msra.mxu0 0.0
    %508 = vmatpush.msra.mxu0 0.0
    %509 = vmatpush.msra.mxu0 0.0
    %510 = vmatpush.msra.mxu0 0.0
    %511 = vmatpush.msra.mxu0 0.0
    %512 = vmatpush.msra.mxu0 %v443
    %513 = vmatmul.f32.gmra.mxu0 %v492
    %v514 = vpop.f32.mrf.mxu0
    %v515 = vadd.f32 %v457, %v514
    %516 = vmatmul.f32.gmra.mxu0 %v495
    %v517 = vpop.f32.mrf.mxu0
    %v518 = vadd.f32 %v458, %v517
    %519 = vdwg.mxu0
    loop: start=0, step=1, limit=16
    $region70: #{_forward_impl.1} parent=1 // loop_pre_header
      _
    $region71: #{_forward_impl.1} parent=1 // loop_header
      %s521 = sphi 0, %s525
      %p522 = scmp.ge.s32.totalorder %s521, 16
      %v526 = vphi %v515, %v598
      %v527 = vphi %v518, %v599
      %v528 = vphi %v455, %v606
      %v529 = vphi %v456, %v607
    $region72: #{_forward_impl.1} parent=1 // loop_header_branch
      %524 = sbr.rel (%p522) target = $region76
    $region73: #{_forward_impl.1} parent=1 // loop_body
      %v530 = vstv %s521
      %vm531 = vcmp.eq.s32.totalorder %v447, %v530
      %vm532 = vcmp.eq.s32.totalorder %v448, %v530
      %v533 = vsel %vm531, 1, 0
      %v534 = vsel %vm532, 1, 0
      %v535 = vcvt.s32.f32 %v533
      %v536 = vcvt.s32.f32 %v534
      %vm537 = vcmp.eq.s32.totalorder %v450, %v530
      %v538 = vsel %vm537, 1, 0
      %v539 = vcvt.s32.f32 %v538
      %v540 = vmul.f32 %v526, %v535
      %v541 = vmul.f32 %v527, %v536
      %vm542 = vcmask 130048
      %v543 = vsel %vm542, %v540, 0.0
      %v544 = vsel %vm542, %v541, 0.0
      %v545 = vadd.f32 %v543, %v544
      %v546 = vrot.slane %v545, 4
      %v547 = vadd.f32 %v545, %v546
      %v548 = vrot.slane %v547, 2
      %v549 = vadd.f32 %v547, %v548
      %v550 = vrot.slane %v549, 1
      %v551 = vadd.f32 %v549, %v550
      %v552 = vmul.f32 %v528, %v535
      %v553 = vmul.f32 %v529, %v536
      %v554 = vsel %vm542, %v552, 0.0
      %v555 = vsel %vm542, %v553, 0.0
      %v556 = vadd.f32 %v554, %v555
      %v557 = vrot.slane %v556, 4
      %v558 = vadd.f32 %v556, %v557
      %v559 = vrot.slane %v558, 2
      %v560 = vadd.f32 %v558, %v559
      %v561 = vrot.slane %v560, 1
      %v562 = vadd.f32 %v560, %v561
      %v563 = vmul.f32 %v551, %v539
      %v564 = vsel %vm542, %v563, 0.0
      %565 = vadd.xlane.f32.xlu0 %v564
      %v566 = vpop.xlane.xlu0 %565
      %v567 = vrcp.pop %v566
      %v568 = vmul.f32 %v566, %v567
      %v569 = vsub.f32 1.0, %v568
      %v570 = vmul.f32 %v567, %v569
      %v571 = vadd.f32 %v567, %v570
      %vm572 = vweird.f32 %v566
      %vm573 = vweird.f32 %v567
      %vm574 = vmor %vm572, %vm573
      %v575 = vsel %vm574, %v567, %v571
      %v576 = vand.u32 2147483647, %v566
      %vm577 = vcmp.eq.f32.partialorder %v576, 8.507059e+37
      %v578 = vand.u32 %v566, 2147483648
      %v579 = vor.u32 1.1754944e-38, %v578
      %v580 = vsel %vm577, %v579, %v575
      %v581 = vmul.f32 1.0, %v580
      %v582 = vmul.f32 %v551, %v581
      %v583 = vmul.f32 %v562, %v581
      %v584 = vmul.f32 %v526, %v539
      %v585 = vmul.f32 %v527, %v539
      %v586 = vsel %vm542, %v584, 0.0
      %587 = vadd.xlane.f32.xlu0 %v586
      %v588 = vpop.xlane.xlu0 %587
      %v589 = vsel %vm542, %v585, 0.0
      %590 = vadd.xlane.f32.xlu0 %v589
      %v591 = vpop.xlane.xlu0 %590
      %v592 = vmul.f32 %v588, %v582
      %v593 = vmul.f32 %v591, %v582
      %v594 = vsub.f32 %v526, %v592
      %v595 = vsub.f32 %v527, %v593
      %v596 = vmul.f32 %v535, %v582
      %v597 = vmul.f32 %v536, %v582
      %v598 = vadd.f32 %v594, %v596
      %v599 = vadd.f32 %v595, %v597
      %v600 = vmul.f32 %v588, %v583
      %v601 = vmul.f32 %v591, %v583
      %v602 = vsub.f32 %v528, %v600
      %v603 = vsub.f32 %v529, %v601
      %v604 = vmul.f32 %v535, %v583
      %v605 = vmul.f32 %v536, %v583
      %v606 = vadd.f32 %v602, %v604
      %v607 = vadd.f32 %v603, %v605
    $region74: #{_forward_impl.1} parent=1 // loop_footer
      %s525 = sadd.s32 1, %s521
    $region75: #{_forward_impl.1} parent=1 // loop_footer_branch
      %520 = sbr.rel target = $region71
    $region76: #{_forward_impl.1} parent=1 // loop_exit
      _
    %vm608 = vcmask 130048
    %v610 = vsel %vm608, %v443, 0
    %612 = vmatpush.msra.mxu0 0.0
    %613 = vmatpush.msra.mxu0 0.0
    %614 = vmatpush.msra.mxu0 0.0
    %615 = vmatpush.msra.mxu0 0.0
    %616 = vmatpush.msra.mxu0 0.0
    %617 = vmatpush.msra.mxu0 0.0
    %618 = vmatpush.msra.mxu0 0.0
    %619 = vmatpush.msra.mxu0 0.0
    %620 = vmatpush.msra.mxu0 0.0
    %621 = vmatpush.msra.mxu0 0.0
    %622 = vmatpush.msra.mxu0 0.0
    %623 = vmatpush.msra.mxu0 0.0
    %624 = vmatpush.msra.mxu0 0.0
    %625 = vmatpush.msra.mxu0 0.0
    %626 = vmatpush.msra.mxu0 %v529
    %627 = vmatpush.msra.mxu0 %v528
    %628 = vmatmul.f32.gmra.mxu0 %v610
    %v629 = vpop.f32.mrf.mxu0
    %v630 = vadd.f32 0.0, %v629
    %631 = vdwg.mxu0
    %v632 = vld [vmem:[%s1] sm:$0xff]
    %633 = vxpose.xlu0.b32.start [1/16] %v632, 128
    %634 = vxpose.xlu0.b32.cont [2/16] 0.0, 128
    %635 = vxpose.xlu0.b32.cont [3/16] 0.0, 128
    %636 = vxpose.xlu0.b32.cont [4/16] 0.0, 128
    %637 = vxpose.xlu0.b32.cont [5/16] 0.0, 128
    %638 = vxpose.xlu0.b32.cont [6/16] 0.0, 128
    %639 = vxpose.xlu0.b32.cont [7/16] 0.0, 128
    %640 = vxpose.xlu0.b32.cont [8/16] 0.0, 128
    %641 = vxpose.xlu0.b32.cont [9/16] 0.0, 128
    %642 = vxpose.xlu0.b32.cont [10/16] 0.0, 128
    %643 = vxpose.xlu0.b32.cont [11/16] 0.0, 128
    %644 = vxpose.xlu0.b32.cont [12/16] 0.0, 128
    %645 = vxpose.xlu0.b32.cont [13/16] 0.0, 128
    %646 = vxpose.xlu0.b32.cont [14/16] 0.0, 128
    %647 = vxpose.xlu0.b32.cont [15/16] 0.0, 128
    %648 = vxpose.xlu0.b32.end [16/16] 0.0, 128
    %v649 = vpop.trf.xlu0
    %v650 = vpop.trf.xlu0
    %v651 = vpop.trf.xlu0
    %v652 = vpop.trf.xlu0
    %v653 = vpop.trf.xlu0
    %v654 = vpop.trf.xlu0
    %v655 = vpop.trf.xlu0
    %v656 = vpop.trf.xlu0
    %v657 = vpop.trf.xlu0
    %v658 = vpop.trf.xlu0
    %v659 = vpop.trf.xlu0
    %v660 = vpop.trf.xlu0
    %v661 = vpop.trf.xlu0
    %v662 = vpop.trf.xlu0
    %v663 = vpop.trf.xlu0
    %v664 = vpop.trf.xlu0
    %v666 = vsel %vm177, %v649, 0
    %668 = vmatpush.msra.mxu0 0.0
    %669 = vmatpush.msra.mxu0 0.0
    %670 = vmatpush.msra.mxu0 0.0
    %671 = vmatpush.msra.mxu0 0.0
    %672 = vmatpush.msra.mxu0 0.0
    %673 = vmatpush.msra.mxu0 0.0
    %674 = vmatpush.msra.mxu0 0.0
    %675 = vmatpush.msra.mxu0 0.0
    %676 = vmatpush.msra.mxu0 0.0
    %677 = vmatpush.msra.mxu0 0.0
    %678 = vmatpush.msra.mxu0 0.0
    %679 = vmatpush.msra.mxu0 0.0
    %680 = vmatpush.msra.mxu0 0.0
    %681 = vmatpush.msra.mxu0 0.0
    %682 = vmatpush.msra.mxu0 0.0
    %683 = vmatpush.msra.mxu0 %v632
    %684 = vmatmul.f32.gmra.mxu0 %v666
    %v685 = vpop.f32.mrf.mxu0
    %v686 = vadd.f32 0.0, %v685
    %687 = vdwg.mxu0
    %v688 = vmul.f32 %v686, 0.3
    %v689 = vadd.f32 %v688, %v457
    loop: start=0, step=1, limit=4
    $region77: #{_forward_impl.1} parent=1 // loop_pre_header
      _
    $region78: #{_forward_impl.1} parent=1 // loop_header
      %s691 = sphi 0, %s695
      %p692 = scmp.ge.s32.totalorder %s691, 4
      %v696 = vphi %v689, %v751
      %v697 = vphi %v455, %v755
    $region79: #{_forward_impl.1} parent=1 // loop_header_branch
      %694 = sbr.rel (%p692) target = $region83
    $region80: #{_forward_impl.1} parent=1 // loop_body
      %v698 = vstv %s691
      %vm699 = vcmp.eq.s32.totalorder %v447, %v698
      %v700 = vsel %vm699, 1, 0
      %v701 = vcvt.s32.f32 %v700
      %vm702 = vcmp.eq.s32.totalorder %v450, %v698
      %v703 = vsel %vm702, 1, 0
      %v704 = vcvt.s32.f32 %v703
      %v705 = vmul.f32 %v696, %v701
      %vm706 = vcmask 27648
      %v707 = vsel %vm706, %v705, 0.0
      %v708 = vrot.slane %v707, 4
      %v709 = vadd.f32 %v707, %v708
      %v710 = vrot.slane %v709, 2
      %v711 = vadd.f32 %v709, %v710
      %v712 = vrot.slane %v711, 1
      %v713 = vadd.f32 %v711, %v712
      %v714 = vmul.f32 %v697, %v701
      %v715 = vsel %vm706, %v714, 0.0
      %v716 = vrot.slane %v715, 4
      %v717 = vadd.f32 %v715, %v716
      %v718 = vrot.slane %v717, 2
      %v719 = vadd.f32 %v717, %v718
      %v720 = vrot.slane %v719, 1
      %v721 = vadd.f32 %v719, %v720
      %v722 = vmul.f32 %v713, %v704
      %vm723 = vcmask 31744
      %v724 = vsel %vm723, %v722, 0.0
      %725 = vadd.xlane.f32.xlu0 %v724
      %v726 = vpop.xlane.xlu0 %725
      %v727 = vrcp.pop %v726
      %v728 = vmul.f32 %v726, %v727
      %v729 = vsub.f32 1.0, %v728
      %v730 = vmul.f32 %v727, %v729
      %v731 = vadd.f32 %v727, %v730
      %vm732 = vweird.f32 %v726
      %vm733 = vweird.f32 %v727
      %vm734 = vmor %vm732, %vm733
      %v735 = vsel %vm734, %v727, %v731
      %v736 = vand.u32 2147483647, %v726
      %vm737 = vcmp.eq.f32.partialorder %v736, 8.507059e+37
      %v738 = vand.u32 %v726, 2147483648
      %v739 = vor.u32 1.1754944e-38, %v738
      %v740 = vsel %vm737, %v739, %v735
      %v741 = vmul.f32 1.0, %v740
      %v742 = vmul.f32 %v713, %v741
      %v743 = vmul.f32 %v721, %v741
      %v744 = vmul.f32 %v696, %v704
      %v745 = vsel %vm706, %v744, 0.0
      %746 = vadd.xlane.f32.xlu0 %v745
      %v747 = vpop.xlane.xlu0 %746
      %v748 = vmul.f32 %v747, %v742
      %v749 = vsub.f32 %v696, %v748
      %v750 = vmul.f32 %v701, %v742
      %v751 = vadd.f32 %v749, %v750
      %v752 = vmul.f32 %v747, %v743
      %v753 = vsub.f32 %v697, %v752
      %v754 = vmul.f32 %v701, %v743
      %v755 = vadd.f32 %v753, %v754
    $region81: #{_forward_impl.1} parent=1 // loop_footer
      %s695 = sadd.s32 1, %s691
    $region82: #{_forward_impl.1} parent=1 // loop_footer_branch
      %690 = sbr.rel target = $region78
    $region83: #{_forward_impl.1} parent=1 // loop_exit
      _
    %vm756 = vcmask 31744
    %v758 = vsel %vm756, %v632, 0
    %vm760 = vcmask 1043456
    %v762 = vsel %vm760, %v697, 0
    %764 = vmatpush.msra.mxu0 0.0
    %765 = vmatpush.msra.mxu0 0.0
    %766 = vmatpush.msra.mxu0 0.0
    %767 = vmatpush.msra.mxu0 0.0
    %768 = vmatpush.msra.mxu0 0.0
    %769 = vmatpush.msra.mxu0 0.0
    %770 = vmatpush.msra.mxu0 0.0
    %771 = vmatpush.msra.mxu0 0.0
    %772 = vmatpush.msra.mxu0 0.0
    %773 = vmatpush.msra.mxu0 0.0
    %774 = vmatpush.msra.mxu0 0.0
    %775 = vmatpush.msra.mxu0 0.0
    %776 = vmatpush.msra.mxu0 0.0
    %777 = vmatpush.msra.mxu0 0.0
    %778 = vmatpush.msra.mxu0 0.0
    %779 = vmatpush.msra.mxu0 %v762
    %780 = vmatmul.f32.gmra.mxu0 %v758
    %v781 = vpop.f32.mrf.mxu0
    %v782 = vadd.f32 0.0, %v781
    %783 = vdwg.mxu0
    %v785 = vsel %vm756, %v782, 0
    %787 = vmatpush.xpose.msra.mxu0 0.0
    %788 = vmatpush.xpose.msra.mxu0 0.0
    %789 = vmatpush.xpose.msra.mxu0 0.0
    %790 = vmatpush.xpose.msra.mxu0 0.0
    %791 = vmatpush.xpose.msra.mxu0 0.0
    %792 = vmatpush.xpose.msra.mxu0 0.0
    %793 = vmatpush.xpose.msra.mxu0 0.0
    %794 = vmatpush.xpose.msra.mxu0 0.0
    %795 = vmatpush.xpose.msra.mxu0 0.0
    %796 = vmatpush.xpose.msra.mxu0 0.0
    %797 = vmatpush.xpose.msra.mxu0 0.0
    %798 = vmatpush.xpose.msra.mxu0 0.0
    %799 = vmatpush.xpose.msra.mxu0 0.0
    %800 = vmatpush.xpose.msra.mxu0 0.0
    %801 = vmatpush.xpose.msra.mxu0 0.0
    %802 = vmatpush.xpose.msra.mxu0 %v758
    %803 = vmatmul.f32.gmra.mxu0 %v785
    %v804 = vpop.f32.mrf.mxu0
    %v805 = vadd.f32 0.0, %v804
    %806 = vdwg.mxu0
    %v807 = vmul.f32 %v805, 0.09
    %v809 = vsel %vm608, %v630, 0
    %811 = vmatpush.xpose.msra.mxu0 0.0
    %812 = vmatpush.xpose.msra.mxu0 0.0
    %813 = vmatpush.xpose.msra.mxu0 0.0
    %814 = vmatpush.xpose.msra.mxu0 0.0
    %815 = vmatpush.xpose.msra.mxu0 0.0
    %816 = vmatpush.xpose.msra.mxu0 0.0
    %817 = vmatpush.xpose.msra.mxu0 0.0
    %818 = vmatpush.xpose.msra.mxu0 0.0
    %819 = vmatpush.xpose.msra.mxu0 0.0
    %820 = vmatpush.xpose.msra.mxu0 0.0
    %821 = vmatpush.xpose.msra.mxu0 0.0
    %822 = vmatpush.xpose.msra.mxu0 0.0
    %823 = vmatpush.xpose.msra.mxu0 0.0
    %824 = vmatpush.xpose.msra.mxu0 0.0
    %825 = vmatpush.xpose.msra.mxu0 0.0
    %826 = vmatpush.xpose.msra.mxu0 %v610
    %827 = vmatmul.f32.gmra.mxu0 %v809
    %v828 = vpop.f32.mrf.mxu0
    %v829 = vadd.f32 %v807, %v828
    %830 = vdwg.mxu0
    %v831 = vpack.c.bf16 %v829, %v829
    %v832 = vpack.c.bf16 %v236, %v236
    %v834 = vsel %vm177, %v831, 0
    %v837 = vsel %vm760, %v832, 0
    %839 = vmatpush.bf16.msra.mxu0 0
    %840 = vmatpush.bf16.msra.mxu0 0
    %841 = vmatpush.bf16.msra.mxu0 0
    %842 = vmatpush.bf16.msra.mxu0 0
    %843 = vmatpush.bf16.msra.mxu0 0
    %844 = vmatpush.bf16.msra.mxu0 0
    %845 = vmatpush.bf16.msra.mxu0 0
    %846 = vmatpush.bf16.msra.mxu0 %v837
    %847 = vmatmul.bf16.gmra.mxu0 %v834
    %v848 = vpop.f32.mrf.mxu0
    %v849 = vadd.f32 0.0, %v848
    %v850 = vpop.f32.mrf.mxu0
    %851 = vdwg.mxu0
    %v852 = vtanh.pop %v849
    %v853 = vpack.c.bf16 %v852, %v852
    %v855 = vsel %vm760, %v853, 0
    %857 = vmatpush.bf16.msra.mxu0 0
    %858 = vmatpush.bf16.msra.mxu0 0
    %859 = vmatpush.bf16.msra.mxu0 0
    %860 = vmatpush.bf16.msra.mxu0 0
    %861 = vmatpush.bf16.msra.mxu0 0
    %862 = vmatpush.bf16.msra.mxu0 0
    %863 = vmatpush.bf16.msra.mxu0 0
    %864 = vmatpush.bf16.msra.mxu0 %v855
    %865 = vmatmul.bf16.gmra.mxu0 %v834
    %v866 = vpop.f32.mrf.mxu0
    %v867 = vadd.f32 0.0, %v866
    %v868 = vpop.f32.mrf.mxu0
    %869 = vdwg.mxu0
    %v870 = vtanh.pop %v867
    %v871 = vpack.c.bf16 %v870, %v870
    %v873 = vsel %vm760, %v871, 0
    %875 = vmatpush.bf16.msra.mxu0 0
    %876 = vmatpush.bf16.msra.mxu0 0
    %877 = vmatpush.bf16.msra.mxu0 0
    %878 = vmatpush.bf16.msra.mxu0 0
    %879 = vmatpush.bf16.msra.mxu0 0
    %880 = vmatpush.bf16.msra.mxu0 0
    %881 = vmatpush.bf16.msra.mxu0 0
    %882 = vmatpush.bf16.msra.mxu0 %v873
    %883 = vmatmul.bf16.gmra.mxu0 %v834
    %v884 = vpop.f32.mrf.mxu0
    %v885 = vadd.f32 0.0, %v884
    %v886 = vpop.f32.mrf.mxu0
    %887 = vdwg.mxu0
    %v888 = vtanh.pop %v885
    %889 = vst.msk [vmem:[#allocation14] sm:$0xff] %vm177, %v888
    // Predicated region
    $region84: #{_forward_impl.1} parent=1 // pred_check
      _
    $region85: #{_forward_impl.1} parent=1 // pred_check_branch
      %891 = sbr.rel (0) target = $region87
    $region86: #{_forward_impl.1} parent=1 // pred_region
      %893 = vsyncadd [#allocation4], 0
      %s895 = sshll.u32 [#allocation14], 4
      %s896 = int_to_ptr.vmem [resolvable:$true] %s895
      %s897 = sshll.u32 %s10, 4
      %s898 = int_to_ptr.hbm [resolvable:$true] %s897
      %900 = dma.vmem_to_hbm [thread:$0]  %s896, 128, %s898, [#allocation4]
    $region87: #{_forward_impl.1} parent=1 // pred_fallthru
      _
    // Predicated region
    $region88: #{_forward_impl.1} parent=1 // pred_check
      _
    $region89: #{_forward_impl.1} parent=1 // pred_check_branch
      %902 = sbr.rel (0) target = $region91
    $region90: #{_forward_impl.1} parent=1 // pred_region
      %904 = dma.done [#allocation4], 128
    $region91: #{_forward_impl.1} parent=1 // pred_fallthru
      _
    %905 = vsyncpa [#allocation3], 1
    %906 = vsyncpa [#allocation6], 1
    %907 = vsyncpa [#allocation9], 1
    %908 = vsyncpa [#allocation12], 1
    %909 = vsyncpa [#allocation4], 1

</llo_original>
